<compile_context>
chip_gen: v6e
topology: v6e:2x2x1
jax: 0.10.0
libtpu: 0.0.40
codegen_flags: <defaults>
</compile_context>

<pallas_src>
from functools import partial

import numpy as np
import jax
import jax.numpy as jnp
from jax.experimental import pallas as pl
from jax.experimental.pallas import tpu as pltpu


_COMPUTE_DTYPE = jnp.bfloat16
_MAX_TM = 1024           # target row-tile; ~1-2 MB/block in bf16 at K=576


def _round_up(x, m):
    return ((x + m - 1) // m) * m


def _pick_row_tile(M, max_tm=_MAX_TM):
    """Row tile ~max_tm, multiple of 16 (bf16 sublane tile), minimal padding."""
    nsteps = -(-M // max_tm)
    tm = _round_up(-(-M // nsteps), 16)
    return tm, tm * nsteps


# ----------------------------------------------------------------------------
# Pallas kernel: (tm, K) x (K, N) matmul with fused bias add and optional ReLU
# ----------------------------------------------------------------------------
def _mm_bias_kernel(x_ref, w_ref, b_ref, o_ref, *, relu):
    acc = jnp.dot(x_ref[...], w_ref[...], preferred_element_type=jnp.float32)
    acc = acc + b_ref[...]                       # (tm, N) + (1, N)
    if relu:
        acc = jnp.maximum(acc, 0.0)
    o_ref[...] = acc.astype(o_ref.dtype)


def matmul_bias(x, w, b, relu, out_dtype=jnp.float32):
    """y = relu?(x @ w + b) on the MXU; bf16 operands, f32 accumulation."""
    M, K = x.shape
    K2, N = w.shape
    assert K == K2, (K, K2)
    tm, Mp = _pick_row_tile(M)
    xc = x.astype(_COMPUTE_DTYPE)
    if Mp != M:
        xc = jnp.pad(xc, ((0, Mp - M), (0, 0)))

    out = pl.pallas_call(
        partial(_mm_bias_kernel, relu=relu),
        out_shape=jax.ShapeDtypeStruct((Mp, N), out_dtype),
        grid=(Mp // tm,),
        in_specs=[
            pl.BlockSpec((tm, K), lambda i: (i, 0)),    # row tile of x
            pl.BlockSpec((K, N), lambda i: (0, 0)),     # full weight
            pl.BlockSpec((1, N), lambda i: (0, 0)),     # bias row (f32)
        ],
        out_specs=pl.BlockSpec((tm, N), lambda i: (i, 0)),
        compiler_params=pltpu.CompilerParams(dimension_semantics=("parallel",)),
    )(xc, w.astype(_COMPUTE_DTYPE), b.reshape(1, N).astype(jnp.float32))
    return out[:M] if Mp != M else out


# ----------------------------------------------------------------------------
# Fused conv kernel (3x3, stride 2, pad 1): 3 row-tap matmuls on VMEM-resident
# data.  Column taps were folded into the channel dim by the wrapper, so the
# kernel only does full/offset row-slab loads + 2-D matmuls (no reshapes).
# ----------------------------------------------------------------------------
def _fused_conv_kernel(ve_ref, vo_ref, w_ref, b_ref, o_ref, *, m, wo):
    # kh = 0: even input rows 0..2Ho-2
    acc = jnp.dot(ve_ref[0, 0:m, :], w_ref[0], preferred_element_type=jnp.float32)
    # kh = 1: odd input rows 1..2Ho-1
    acc = acc + jnp.dot(vo_ref[0], w_ref[1], preferred_element_type=jnp.float32)
    # kh = 2: even input rows 2..2Ho  (same tensor, shifted by one output row)
    acc = acc + jnp.dot(ve_ref[0, wo:wo + m, :], w_ref[2],
                        preferred_element_type=jnp.float32)
    acc = acc + b_ref[...]
    o_ref[0] = jnp.maximum(acc, 0.0).astype(o_ref.dtype)


def _conv_fused(x_nhwc, w_oihw, b, out_dtype):
    B, H, W, C = x_nhwc.shape
    Cout = w_oihw.shape[0]
    Ho, Wo = H // 2, W // 2

    xc = x_nhwc.astype(_COMPUTE_DTYPE)
    xp = jnp.pad(xc, ((0, 0), (1, 1), (1, 1), (0, 0)))
    # Fold the 3 column taps into channels: U[b,h,j,kw*C+c] = xp[b,h,2j+kw,c].
    u = jnp.concatenate([xp[:, :, kw:kw + 2 * Wo:2, :] for kw in range(3)], axis=-1)
    ve = u[:, 0::2].reshape(B, (Ho + 1) * Wo, 3 * C)        # even rows (+1 halo row)
    vo = u[:, 1::2][:, :Ho].reshape(B, Ho * Wo, 3 * C)      # odd rows
    # weight: wr[kh, kw*C+c, o] = w_oihw[o, c, kh, kw]  (matches U channel order)
    wr = jnp.transpose(w_oihw, (2, 3, 1, 0)).reshape(3, 3 * C, Cout)

    out = pl.pallas_call(
        partial(_fused_conv_kernel, m=Ho * Wo, wo=Wo),
        out_shape=jax.ShapeDtypeStruct((B, Ho * Wo, Cout), out_dtype),
        grid=(B,),
        in_specs=[
            pl.BlockSpec((1, (Ho + 1) * Wo, 3 * C), lambda i: (i, 0, 0)),
            pl.BlockSpec((1, Ho * Wo, 3 * C), lambda i: (i, 0, 0)),
            pl.BlockSpec((3, 3 * C, Cout), lambda i: (0, 0, 0)),
            pl.BlockSpec((1, Cout), lambda i: (0, 0)),
        ],
        out_specs=pl.BlockSpec((1, Ho * Wo, Cout), lambda i: (i, 0, 0)),
        compiler_params=pltpu.CompilerParams(dimension_semantics=("parallel",)),
    )(ve, vo, wr.astype(_COMPUTE_DTYPE), b.reshape(1, Cout).astype(jnp.float32))
    return out.reshape(B, Ho, Wo, Cout)


# ----------------------------------------------------------------------------
# im2col fallback path (used for conv1 / conv4 and if fused lowering fails)
# ----------------------------------------------------------------------------
def _im2col_3x3_s2_p1(x_nhwc):
    B, H, W, C = x_nhwc.shape
    xp = jnp.pad(x_nhwc, ((0, 0), (1, 1), (1, 1), (0, 0)))
    Ho, Wo = H // 2, W // 2
    cols = [xp[:, kh:kh + 2 * Ho:2, kw:kw + 2 * Wo:2, :]
            for kh in range(3) for kw in range(3)]
    return jnp.concatenate(cols, axis=-1)                   # (B, Ho, Wo, 9C)


def _conv_im2col(x_nhwc, w_oihw, b, out_dtype):
    B, H, W, C = x_nhwc.shape
    Cout = w_oihw.shape[0]
    Ho, Wo = H // 2, W // 2
    cols = _im2col_3x3_s2_p1(x_nhwc.astype(_COMPUTE_DTYPE))
    wm = jnp.transpose(w_oihw, (2, 3, 1, 0)).reshape(9 * C, Cout)
    y = matmul_bias(cols.reshape(B * Ho * Wo, 9 * C), wm, b,
                    relu=True, out_dtype=out_dtype)
    return y.reshape(B, Ho, Wo, Cout)


_FUSED_CONV_STATUS = {}   # shape-key -> bool (memoized fallback decision)


def conv2d_3x3_s2_p1(x_nhwc, w_oihw, b, *, out_dtype=_COMPUTE_DTYPE,
                     allow_fused=True):
    """PyTorch-equivalent Conv2d(Cin, Cout, 3, stride=2, padding=1) + ReLU."""
    key = (tuple(x_nhwc.shape[1:]), int(w_oihw.shape[0]))
    if allow_fused and x_nhwc.shape[-1] >= 16 and _FUSED_CONV_STATUS.get(key, True):
        try:
            y = _conv_fused(x_nhwc, w_oihw, b, out_dtype)
            _FUSED_CONV_STATUS[key] = True
            return y
        except Exception:
            # Mosaic lowering unavailable for this shape on this backend ->
            # fall back to the numerically identical im2col path.
            # (Call this function eagerly, not under jax.jit, so the fallback
            #  can trigger; the script below does so.)
            _FUSED_CONV_STATUS[key] = False
    return _conv_im2col(x_nhwc, w_oihw, b, out_dtype)


# ----------------------------------------------------------------------------
# Fused FC tail: h = relu(x @ Wstem + bstem); out = h @ Whead + bhead
# (actor & critic stems merged into one 144->512 matmul, heads merged into one
#  block-diagonal 512->128 matmul -> lane-dense f32 output)
# ----------------------------------------------------------------------------
def _fc_tail_kernel(x_ref, ws_ref, bs_ref, wh_ref, bh_ref, o_ref):
    h = jnp.dot(x_ref[...], ws_ref[...], preferred_element_type=jnp.float32)
    h = jnp.maximum(h + bs_ref[...], 0.0)
    out = jnp.dot(h.astype(wh_ref.dtype), wh_ref[...],
                  preferred_element_type=jnp.float32)
    o_ref[...] = (out + bh_ref[...]).astype(o_ref.dtype)


def fc_tail(flat, ws, bs, wh, bh):
    M, K = flat.shape
    Hd = ws.shape[1]
    N = wh.shape[1]
    tm, Mp = _pick_row_tile(M)
    xc = flat.astype(_COMPUTE_DTYPE)
    if Mp != M:
        xc = jnp.pad(xc, ((0, Mp - M), (0, 0)))
    out = pl.pallas_call(
        _fc_tail_kernel,
        out_shape=jax.ShapeDtypeStruct((Mp, N), jnp.float32),
        grid=(Mp // tm,),
        in_specs=[
            pl.BlockSpec((tm, K), lambda i: (i, 0)),
            pl.BlockSpec((K, Hd), lambda i: (0, 0)),
            pl.BlockSpec((1, Hd), lambda i: (0, 0)),
            pl.BlockSpec((Hd, N), lambda i: (0, 0)),
            pl.BlockSpec((1, N), lambda i: (0, 0)),
        ],
        out_specs=pl.BlockSpec((tm, N), lambda i: (i, 0)),
        compiler_params=pltpu.CompilerParams(dimension_semantics=("parallel",)),
    )(xc, ws.astype(_COMPUTE_DTYPE), bs.reshape(1, Hd).astype(jnp.float32),
      wh.astype(_COMPUTE_DTYPE), bh.reshape(1, N).astype(jnp.float32))
    return out[:M]


# ----------------------------------------------------------------------------
# Parameter initialization (deterministic xavier-uniform, zero bias)
# ----------------------------------------------------------------------------
def _xavier(key, shape, fan_in, fan_out):
    limit = float(np.sqrt(6.0 / (fan_in + fan_out)))
    return jax.random.uniform(key, shape, jnp.float32, -limit, limit)


def init_params(key):
    ks = jax.random.split(key, 8)
    p = {}
    conv_defs = [("conv1", 4, 64), ("conv2", 64, 64), ("conv3", 64, 64), ("conv4", 64, 4)]
    for i, (name, cin, cout) in enumerate(conv_defs):
        p[name + "_w"] = _xavier(ks[i], (cout, cin, 3, 3), cin * 9, cout * 9)  # OIHW
        p[name + "_b"] = jnp.zeros((cout,), jnp.float32)
    fc_defs = [("fc1_a", 144, 256), ("fc2_a", 256, 6), ("fc3_v", 144, 256), ("fc4_v", 256, 1)]
    for i, (name, fin, fout) in enumerate(fc_defs):
        p[name + "_w"] = _xavier(ks[4 + i], (fin, fout), fin, fout)            # (in, out)
        p[name + "_b"] = jnp.zeros((fout,), jnp.float32)
    return p


def _nhwc_flat_perm():
    # NHWC flatten index m = i*24 + j*4 + c  ->  PyTorch NCHW flatten c*36 + i*6 + j
    idx = np.arange(144)
    i, r = idx // 24, idx % 24
    j, c = r // 4, r % 4
    return jnp.asarray(c * 36 + i * 6 + j, dtype=jnp.int32)


# ----------------------------------------------------------------------------
# Full forward pass (matches Net.forward)
# ----------------------------------------------------------------------------
def net_forward(params, x_nchw):
    x = jnp.transpose(x_nchw, (0, 2, 3, 1))                                    # NHWC (B,96,96,4)

    x = conv2d_3x3_s2_p1(x, params["conv1_w"], params["conv1_b"],
                         allow_fused=False)                                    # (B,48,48,64)
    x = conv2d_3x3_s2_p1(x, params["conv2_w"], params["conv2_b"])              # (B,24,24,64)
    x = conv2d_3x3_s2_p1(x, params["conv3_w"], params["conv3_b"])              # (B,12,12,64)

    # conv4 (576 -> 4): tiny; im2col + matmul, kept flattened in NHWC order.
    # NOTE: its N=4 store is masked but negligible at this size.
    B = x.shape[0]
    cols4 = _im2col_3x3_s2_p1(x).reshape(B * 36, 9 * 64)
    w4 = jnp.transpose(params["conv4_w"], (2, 3, 1, 0)).reshape(9 * 64, 4)
    h4 = matmul_bias(cols4, w4, params["conv4_b"], relu=True,
                     out_dtype=_COMPUTE_DTYPE)
    flat = h4.reshape(B, 144)                        # ordering (i, j, c)

    # Merged FC tail.  Permuting the stem weight rows reproduces PyTorch's
    # NCHW view(-1, 144) ordering without any activation transpose.
    perm = _nhwc_flat_perm()
    ws = jnp.concatenate([params["fc1_a_w"], params["fc3_v_w"]], axis=1)[perm, :]  # (144,512)
    bs = jnp.concatenate([params["fc1_a_b"], params["fc3_v_b"]])                   # (512,)
    wh = jnp.zeros((512, 128), jnp.float32)
    wh = wh.at[:256, 0:6].set(params["fc2_a_w"])
    wh = wh.at[256:, 6:7].set(params["fc4_v_w"])
    bh = jnp.zeros((128,), jnp.float32)
    bh = bh.at[0:6].set(params["fc2_a_b"]).at[6].set(params["fc4_v_b"][0])

    out = fc_tail(flat, ws, bs, wh, bh)              # (B,128) f32, lane-dense
    logit = out[:, 0:6]
    value = out[:, 6:7]
    return logit, value


# ----------------------------------------------------------------------------
# Pure-JAX reference (f32) for a non-fatal numerical sanity check
# ----------------------------------------------------------------------------
def _ref_forward(params, x_nchw):
    def conv(x, w, b):
        y = jax.lax.conv_general_dilated(
            x, w, (2, 2), ((1, 1), (1, 1)),
            dimension_numbers=("NCHW", "OIHW", "NCHW"))
        return jax.nn.relu(y + b[None, :, None, None])

    x = conv(x_nchw, params["conv1_w"], params["conv1_b"])
    x = conv(x, params["conv2_w"], params["conv2_b"])
    x = conv(x, params["conv3_w"], params["conv3_b"])
    x = conv(x, params["conv4_w"], params["conv4_b"])
    flat = x.reshape(x.shape[0], -1)
    ha = jax.nn.relu(flat @ params["fc1_a_w"] + params["fc1_a_b"])
    logit = ha @ params["fc2_a_w"] + params["fc2_a_b"]
    hv = jax.nn.relu(flat @ params["fc3_v_w"] + params["fc3_v_b"])
    value = hv @ params["fc4_v_w"] + params["fc4_v_b"]
    return logit, value


if __name__ == "__main__":
    key = jax.random.PRNGKey(0)
    pkey, xkey = jax.random.split(key)
    params = init_params(pkey)

    # 96x96 spatial size is required so the flatten yields 6*6*4 = 144 features.
    x = jax.random.uniform(xkey, (2, 4, 96, 96), jnp.float32)

    logit, value = net_forward(params, x)
    jax.block_until_ready((logit, value))
    assert logit.shape == (2, 6) and value.shape == (2, 1)

    # Non-fatal bf16-vs-f32 sanity check against the pure-JAX reference.
    ref_logit, ref_value = _ref_forward(params, x)
    dl = float(jnp.max(jnp.abs(logit - ref_logit)))
    dv = float(jnp.max(jnp.abs(value - ref_value)))
    print(f"max |logit - ref| = {dl:.3e}, max |value - ref| = {dv:.3e} (bf16 compute)")

    print("KERNEL_OK")
</pallas_src>

<mosaic_0001>
module attributes {stable_mosaic.version = 11 : i64} {
  func.func @_mm_bias_kernel(%arg0: i32, %arg1: memref<928x36xbf16, #tpu.memory_space<vmem>>, %arg2: memref<36x64xbf16, #tpu.memory_space<vmem>>, %arg3: memref<1x64xf32, #tpu.memory_space<vmem>>, %arg4: memref<928x64xbf16, #tpu.memory_space<vmem>>) attributes {dimension_semantics = [#tpu.dimension_semantics<parallel>], iteration_bounds = array<i64: 5>, scalar_prefetch = 0 : i64, scratch_operands = 0 : i64, tpu.core_type = #tpu.core_type<tc>, window_params = [{transform_indices = @transform_0, window_bounds = array<i64: 928, 36>}, {pipeline_mode = #tpu.pipeline_mode<synchronous>, transform_indices = @transform_1, window_bounds = array<i64: 36, 64>}, {pipeline_mode = #tpu.pipeline_mode<synchronous>, transform_indices = @transform_2, window_bounds = array<i64: 1, 64>}, {transform_indices = @transform_3, window_bounds = array<i64: 928, 64>}]} {
    %c0 = arith.constant 0 : index
    %c0_0 = arith.constant 0 : index
    %0 = vector.load %arg1[%c0, %c0_0] : memref<928x36xbf16, #tpu.memory_space<vmem>>, vector<928x36xbf16>
    %c0_1 = arith.constant 0 : index
    %c0_2 = arith.constant 0 : index
    %1 = vector.load %arg2[%c0_1, %c0_2] : memref<36x64xbf16, #tpu.memory_space<vmem>>, vector<36x64xbf16>
    %cst = arith.constant dense<0.000000e+00> : vector<928x64xf32>
    %2 = tpu.matmul %0, %1, %cst {dimension_numbers = #tpu.dot_dimension_numbers<[1], [0], [0], [1], [0, 0, 1, 1], [], []>} : vector<928x36xbf16>, vector<36x64xbf16>, vector<928x64xf32> -> vector<928x64xf32>
    %c0_3 = arith.constant 0 : index
    %c0_4 = arith.constant 0 : index
    %3 = vector.load %arg3[%c0_3, %c0_4] : memref<1x64xf32, #tpu.memory_space<vmem>>, vector<1x64xf32>
    %4 = vector.broadcast %3 : vector<1x64xf32> to vector<928x64xf32>
    %5 = arith.addf %2, %4 : vector<928x64xf32>
    %cst_5 = arith.constant 0.000000e+00 : f32
    %6 = vector.broadcast %cst_5 : f32 to vector<928x64xf32>
    %7 = arith.maximumf %5, %6 : vector<928x64xf32>
    %8 = arith.truncf %7 : vector<928x64xf32> to vector<928x64xbf16>
    %c0_6 = arith.constant 0 : index
    %c0_7 = arith.constant 0 : index
    %9 = vector.load %arg4[%c0_6, %c0_7] : memref<928x64xbf16, #tpu.memory_space<vmem>>, vector<928x64xbf16>
    tpu.vector_store %arg4[%c0_6, %c0_7], %8 {strides = array<i32>} : memref<928x64xbf16, #tpu.memory_space<vmem>>, vector<928x64xbf16>,
    return
  }
  func.func @transform_0(%arg0: i32) -> (i32, i32) {
    %c0_i32 = arith.constant 0 : i32
    %c0_i32_0 = arith.constant 0 : i32
    return %arg0, %c0_i32 : i32, i32
  }
  func.func @transform_1(%arg0: i32) -> (i32, i32) {
    %c0_i32 = arith.constant 0 : i32
    %c0_i32_0 = arith.constant 0 : i32
    %c0_i32_1 = arith.constant 0 : i32
    return %c0_i32, %c0_i32_0 : i32, i32
  }
  func.func @transform_2(%arg0: i32) -> (i32, i32) {
    %c0_i32 = arith.constant 0 : i32
    %c0_i32_0 = arith.constant 0 : i32
    %c0_i32_1 = arith.constant 0 : i32
    return %c0_i32, %c0_i32_0 : i32, i32
  }
  func.func @transform_3(%arg0: i32) -> (i32, i32) {
    %c0_i32 = arith.constant 0 : i32
    %c0_i32_0 = arith.constant 0 : i32
    return %arg0, %c0_i32 : i32, i32
  }
}

</mosaic_0001>

<llo_original>
// kernel: tpu_custom_call.1
$region0: #{tpu_custom_call.1}
  #allocation0 [shape = 'u32[]', space=smem, size = 0x4, offset = 0x4, fixed_abs, tag = 'smem constant byte address 0x4 - core index']
  #allocation1 [shape = 'u32[144,128]{1,0:T(1,128)}', space=vmem, size = 0x12000, scoped, tag = 'internal scratch']
  %s0 = inlined_call_operand.vmem [shape: bf16[4640,36], index: 0, kind: input, shape index: {}]
  %s1 = inlined_call_operand.vmem [shape: bf16[36,64], index: 1, kind: input, shape index: {}]
  %s2 = inlined_call_operand.vmem [shape: f32[1,64], index: 2, kind: input, shape index: {}]
  %s3 = inlined_call_operand.vmem [shape: bf16[4640,64], index: 3, kind: output, shape index: {}]
  %s4 = sld [smem:[#allocation0]]
  $region45: #{tpu_custom_call.1} parent=0
    _
  %s6 = ssub.s32 1, %s4
  %s7 = scalar_select 0, %s6, %s4
  loop: start=0, step=1, limit=7
  $region2: #{tpu_custom_call.1} parent=0 // loop_pre_header
    _
  $region3: #{tpu_custom_call.1} parent=0 // loop_header
    %s9 = sphi 0, %s13
    %p10 = scmp.ge.s32.totalorder %s9, 7
    %s19 = sphi 0, %s21
    %s22 = sphi 0, %s19
    %s23 = sphi 0, %s22
    %s39 = sphi 0, %s23
    %s43 = sphi 0, %s43
    %s45 = sphi 0, %s43
    %s46 = sphi 0, %s45
    %s60 = sphi 0, %s46
    %s64 = sphi 0, %s64
    %s66 = sphi 0, %s64
    %s67 = sphi 0, %s66
    %s81 = sphi 0, %s67
    %s87 = sphi 0, %s89
    %s90 = sphi 0, %s87
    %s91 = sphi 0, %s90
    %s107 = sphi 0, %s91
  $region4: #{tpu_custom_call.1} parent=0 // loop_header_branch
    %12 = sbr.rel (%p10) target = $region8
  $region5: #{tpu_custom_call.1} parent=0 // loop_body
    %s14 = ssub.s32 %s9, 1
    %s15 = ssub.s32 %s9, 2
    %s16 = sadd.s32 %s9, 1
    %s17 = ssub.s32 %s9, %s16
    %p18 = scmp.eq.s32.totalorder %s17, 0
    %s20 = sadd.s32 %s19, 1
    %s21 = scalar_select %p18, %s19, %s20
    %p24 = pneg %p18
    %p25 = scmp.eq.s32.totalorder %s9, 4
    %p26 = por %p24, %p25
    %p27 = scmp.ne.s32.totalorder %s19, %s22
    %p28 = scmp.eq.s32.totalorder %s9, 0
    %p29 = por %p27, %p28
    %p30 = scmp.ne.s32.totalorder %s19, %s22
    %p31 = scmp.eq.s32.totalorder %s14, 4
    %p32 = por %p30, %p31
    %p33 = scmp.ne.s32.totalorder %s22, %s23
    %p34 = scmp.eq.s32.totalorder %s14, 0
    %p35 = por %p33, %p34
    %p36 = scmp.ne.s32.totalorder %s22, %s23
    %p37 = scmp.eq.s32.totalorder %s15, 4
    %p38 = por %p36, %p37
    %p40 = scmp.ne.s32.totalorder %s23, %s39
    %p41 = scmp.eq.s32.totalorder %s15, 0
    %p42 = por %p40, %p41
    %s44 = sadd.s32 %s43, 1
    %p47 = scmp.eq.s32.totalorder %s9, 4
    %p48 = scmp.ne.s32.totalorder %s43, %s45
    %p49 = scmp.eq.s32.totalorder %s9, 0
    %p50 = por %p48, %p49
    %p51 = scmp.ne.s32.totalorder %s43, %s45
    %p52 = scmp.eq.s32.totalorder %s14, 4
    %p53 = por %p51, %p52
    %p54 = scmp.ne.s32.totalorder %s45, %s46
    %p55 = scmp.eq.s32.totalorder %s14, 0
    %p56 = por %p54, %p55
    %p57 = scmp.ne.s32.totalorder %s45, %s46
    %p58 = scmp.eq.s32.totalorder %s15, 4
    %p59 = por %p57, %p58
    %p61 = scmp.ne.s32.totalorder %s46, %s60
    %p62 = scmp.eq.s32.totalorder %s15, 0
    %p63 = por %p61, %p62
    %s65 = sadd.s32 %s64, 1
    %p68 = scmp.eq.s32.totalorder %s9, 4
    %p69 = scmp.ne.s32.totalorder %s64, %s66
    %p70 = scmp.eq.s32.totalorder %s9, 0
    %p71 = por %p69, %p70
    %p72 = scmp.ne.s32.totalorder %s64, %s66
    %p73 = scmp.eq.s32.totalorder %s14, 4
    %p74 = por %p72, %p73
    %p75 = scmp.ne.s32.totalorder %s66, %s67
    %p76 = scmp.eq.s32.totalorder %s14, 0
    %p77 = por %p75, %p76
    %p78 = scmp.ne.s32.totalorder %s66, %s67
    %p79 = scmp.eq.s32.totalorder %s15, 4
    %p80 = por %p78, %p79
    %p82 = scmp.ne.s32.totalorder %s67, %s81
    %p83 = scmp.eq.s32.totalorder %s15, 0
    %p84 = por %p82, %p83
    %s85 = ssub.s32 %s9, %s16
    %p86 = scmp.eq.s32.totalorder %s85, 0
    %s88 = sadd.s32 %s87, 1
    %s89 = scalar_select %p86, %s87, %s88
    %p92 = pneg %p86
    %p93 = scmp.eq.s32.totalorder %s9, 4
    %p94 = por %p92, %p93
    %p95 = scmp.ne.s32.totalorder %s87, %s90
    %p96 = scmp.eq.s32.totalorder %s9, 0
    %p97 = por %p95, %p96
    %p98 = scmp.ne.s32.totalorder %s87, %s90
    %p99 = scmp.eq.s32.totalorder %s14, 4
    %p100 = por %p98, %p99
    %p101 = scmp.ne.s32.totalorder %s90, %s91
    %p102 = scmp.eq.s32.totalorder %s14, 0
    %p103 = por %p101, %p102
    %p104 = scmp.ne.s32.totalorder %s90, %s91
    %p105 = scmp.eq.s32.totalorder %s15, 4
    %p106 = por %p104, %p105
    %p108 = scmp.ne.s32.totalorder %s91, %s107
    %p109 = scmp.eq.s32.totalorder %s15, 0
    %p110 = por %p108, %p109
    %p111 = scmp.le.s32.totalorder 1, %s9
    %p112 = scmp.lt.s32.totalorder %s9, 6
    %p113 = pnand %p111, %p112
    %p114 = pneg %p113
    // Predicated region
    $region9: #{tpu_custom_call.1} parent=5 // pred_check
      _
    $region10: #{tpu_custom_call.1} parent=5 // pred_check_branch
      %116 = sbr.rel (%p113) target = $region12
    $region11: #{tpu_custom_call.1} parent=5 // pred_region
      %s117 = ssub.s32 %s9, 1
      // Predicated region
      $region13: #{tpu_custom_call.1} parent=11 // pred_check
        %p118 = pneg %p56
      $region14: #{tpu_custom_call.1} parent=11 // pred_check_branch
        %120 = sbr.rel (%p118) target = $region16
      $region15: #{tpu_custom_call.1} parent=11 // pred_region
        _
      $region16: #{tpu_custom_call.1} parent=11 // pred_fallthru
        _
      // Predicated region
      $region17: #{tpu_custom_call.1} parent=11 // pred_check
        %p121 = pneg %p77
      $region18: #{tpu_custom_call.1} parent=11 // pred_check_branch
        %123 = sbr.rel (%p121) target = $region20
      $region19: #{tpu_custom_call.1} parent=11 // pred_region
        _
      $region20: #{tpu_custom_call.1} parent=11 // pred_fallthru
        _
    $region12: #{tpu_custom_call.1} parent=5 // pred_fallthru
      _
    %p124 = scmp.lt.s32.totalorder %s9, 5
    // Predicated region
    $region21: #{tpu_custom_call.1} parent=5 // pred_check
      %p125 = pneg %p124
    $region22: #{tpu_custom_call.1} parent=5 // pred_check_branch
      %127 = sbr.rel (%p125) target = $region24
    $region23: #{tpu_custom_call.1} parent=5 // pred_region
      // Predicated region
      $region25: #{tpu_custom_call.1} parent=23 // pred_check
        %p128 = pneg %p29
      $region26: #{tpu_custom_call.1} parent=23 // pred_check_branch
        %130 = sbr.rel (%p128) target = $region28
      $region27: #{tpu_custom_call.1} parent=23 // pred_region
        %s131 = smul.u32 116, %s9
        %p132 = scmp.lt.s32.totalorder %s131, 579
        %s133 = scalar_select %p132, %s131, 579
        %s134 = smul.addr %s133, 4
        %s135 = scalar_lea.vmem %s0, %s134
        %s136 = smul.u32 116, %s9
      $region28: #{tpu_custom_call.1} parent=23 // pred_fallthru
        _
    $region24: #{tpu_custom_call.1} parent=5 // pred_fallthru
      _
    %p137 = scmp.le.s32.totalorder 1, %s9
    %p138 = scmp.lt.s32.totalorder %s9, 6
    %p139 = pnand %p137, %p138
    %p140 = pneg %p139
    // Predicated region
    $region29: #{tpu_custom_call.1} parent=5 // pred_check
      _
    $region30: #{tpu_custom_call.1} parent=5 // pred_check_branch
      %142 = sbr.rel (%p139) target = $region32
    $region31: #{tpu_custom_call.1} parent=5 // pred_region
      %s143 = ssub.s32 %s9, 1
      %s144 = smul.u32 116, %s14
      %p145 = scmp.lt.s32.totalorder %s144, 579
      %s146 = scalar_select %p145, %s144, 579
      %s147 = smul.addr %s146, 4
      %s148 = scalar_lea.vmem %s0, %s147
      %p149 = pneg %p35
      %p150 = pneg %p32
      %p151 = pneg %p56
      %p152 = pneg %p53
      %p153 = pneg %p77
      %p154 = pneg %p74
      %p155 = pneg %p103
      %p156 = pneg %p100
      %s157 = smul.u32 116, %s14
      %p158 = scmp.lt.s32.totalorder %s157, 579
      %s159 = scalar_select %p158, %s157, 579
      %s160 = smul.addr %s159, 4
      %s161 = scalar_lea.vmem %s3, %s160
      %s162 = smul.u32 116, %s14
      %p163 = scmp.lt.s32.totalorder %s162, 579
      %s164 = scalar_select %p163, %s162, 579
      %s165 = smul.addr %s164, 4
      %s166 = scalar_lea.vmem %s0, %s165
      %s167 = smul.u32 116, %s14
      %s168 = smul.u32 116, %s14
      %p169 = scmp.lt.s32.totalorder %s168, 579
      %s170 = scalar_select %p169, %s168, 579
      %s171 = smul.addr %s170, 4
      %s172 = scalar_lea.vmem %s3, %s171
      %s173 = smul.u32 116, %s14
      %v175 = vld [vmem:[%s166] sm:$0xf]
      %v176 = vld [vmem:[%s166 + $0x4] sm:$0xf]
      %v177 = vld [vmem:[%s166 + $0x8] sm:$0xf]
      %v178 = vld [vmem:[%s166 + $0xc] sm:$0xf]
      %v179 = vld [vmem:[%s166 + $0x10] sm:$0xf]
      %v180 = vld [vmem:[%s166 + $0x14] sm:$0xf]
      %v181 = vld [vmem:[%s166 + $0x18] sm:$0xf]
      %v182 = vld [vmem:[%s166 + $0x1c] sm:$0xf]
      %v183 = vld [vmem:[%s166 + $0x20] sm:$0xf]
      %v184 = vld [vmem:[%s166 + $0x24] sm:$0xf]
      %v185 = vld [vmem:[%s166 + $0x28] sm:$0xf]
      %v186 = vld [vmem:[%s166 + $0x2c] sm:$0xf]
      %v187 = vld [vmem:[%s166 + $0x30] sm:$0xf]
      %v188 = vld [vmem:[%s166 + $0x34] sm:$0xf]
      %v189 = vld [vmem:[%s166 + $0x38] sm:$0xf]
      %v190 = vld [vmem:[%s166 + $0x3c] sm:$0xf]
      %v191 = vld [vmem:[%s166 + $0x40] sm:$0xf]
      %v192 = vld [vmem:[%s166 + $0x44] sm:$0xf]
      %v193 = vld [vmem:[%s166 + $0x48] sm:$0xf]
      %v194 = vld [vmem:[%s166 + $0x4c] sm:$0xf]
      %v195 = vld [vmem:[%s166 + $0x50] sm:$0xf]
      %v196 = vld [vmem:[%s166 + $0x54] sm:$0xf]
      %v197 = vld [vmem:[%s166 + $0x58] sm:$0xf]
      %v198 = vld [vmem:[%s166 + $0x5c] sm:$0xf]
      %v199 = vld [vmem:[%s166 + $0x60] sm:$0xf]
      %v200 = vld [vmem:[%s166 + $0x64] sm:$0xf]
      %v201 = vld [vmem:[%s166 + $0x68] sm:$0xf]
      %v202 = vld [vmem:[%s166 + $0x6c] sm:$0xf]
      %v203 = vld [vmem:[%s166 + $0x70] sm:$0xf]
      %v204 = vld [vmem:[%s166 + $0x74] sm:$0xf]
      %v205 = vld [vmem:[%s166 + $0x78] sm:$0xf]
      %v206 = vld [vmem:[%s166 + $0x7c] sm:$0xf]
      %v207 = vld [vmem:[%s166 + $0x80] sm:$0xf]
      %v208 = vld [vmem:[%s166 + $0x84] sm:$0xf]
      %v209 = vld [vmem:[%s166 + $0x88] sm:$0xf]
      %v210 = vld [vmem:[%s166 + $0x8c] sm:$0xf]
      %v211 = vld [vmem:[%s166 + $0x90] sm:$0xf]
      %v212 = vld [vmem:[%s166 + $0x94] sm:$0xf]
      %v213 = vld [vmem:[%s166 + $0x98] sm:$0xf]
      %v214 = vld [vmem:[%s166 + $0x9c] sm:$0xf]
      %v215 = vld [vmem:[%s166 + $0xa0] sm:$0xf]
      %v216 = vld [vmem:[%s166 + $0xa4] sm:$0xf]
      %v217 = vld [vmem:[%s166 + $0xa8] sm:$0xf]
      %v218 = vld [vmem:[%s166 + $0xac] sm:$0xf]
      %v219 = vld [vmem:[%s166 + $0xb0] sm:$0xf]
      %v220 = vld [vmem:[%s166 + $0xb4] sm:$0xf]
      %v221 = vld [vmem:[%s166 + $0xb8] sm:$0xf]
      %v222 = vld [vmem:[%s166 + $0xbc] sm:$0xf]
      %v223 = vld [vmem:[%s166 + $0xc0] sm:$0xf]
      %v224 = vld [vmem:[%s166 + $0xc4] sm:$0xf]
      %v225 = vld [vmem:[%s166 + $0xc8] sm:$0xf]
      %v226 = vld [vmem:[%s166 + $0xcc] sm:$0xf]
      %v227 = vld [vmem:[%s166 + $0xd0] sm:$0xf]
      %v228 = vld [vmem:[%s166 + $0xd4] sm:$0xf]
      %v229 = vld [vmem:[%s166 + $0xd8] sm:$0xf]
      %v230 = vld [vmem:[%s166 + $0xdc] sm:$0xf]
      %v231 = vld [vmem:[%s166 + $0xe0] sm:$0xf]
      %v232 = vld [vmem:[%s166 + $0xe4] sm:$0xf]
      %v233 = vld [vmem:[%s166 + $0xe8] sm:$0xf]
      %v234 = vld [vmem:[%s166 + $0xec] sm:$0xf]
      %v235 = vld [vmem:[%s166 + $0xf0] sm:$0xf]
      %v236 = vld [vmem:[%s166 + $0xf4] sm:$0xf]
      %v237 = vld [vmem:[%s166 + $0xf8] sm:$0xf]
      %v238 = vld [vmem:[%s166 + $0xfc] sm:$0xf]
      %v239 = vld [vmem:[%s166 + $0x100] sm:$0xf]
      %v240 = vld [vmem:[%s166 + $0x104] sm:$0xf]
      %v241 = vld [vmem:[%s166 + $0x108] sm:$0xf]
      %v242 = vld [vmem:[%s166 + $0x10c] sm:$0xf]
      %v243 = vld [vmem:[%s166 + $0x110] sm:$0xf]
      %v244 = vld [vmem:[%s166 + $0x114] sm:$0xf]
      %v245 = vld [vmem:[%s166 + $0x118] sm:$0xf]
      %v246 = vld [vmem:[%s166 + $0x11c] sm:$0xf]
      %v247 = vld [vmem:[%s166 + $0x120] sm:$0xf]
      %v248 = vld [vmem:[%s166 + $0x124] sm:$0xf]
      %v249 = vld [vmem:[%s166 + $0x128] sm:$0xf]
      %v250 = vld [vmem:[%s166 + $0x12c] sm:$0xf]
      %v251 = vld [vmem:[%s166 + $0x130] sm:$0xf]
      %v252 = vld [vmem:[%s166 + $0x134] sm:$0xf]
      %v253 = vld [vmem:[%s166 + $0x138] sm:$0xf]
      %v254 = vld [vmem:[%s166 + $0x13c] sm:$0xf]
      %v255 = vld [vmem:[%s166 + $0x140] sm:$0xf]
      %v256 = vld [vmem:[%s166 + $0x144] sm:$0xf]
      %v257 = vld [vmem:[%s166 + $0x148] sm:$0xf]
      %v258 = vld [vmem:[%s166 + $0x14c] sm:$0xf]
      %v259 = vld [vmem:[%s166 + $0x150] sm:$0xf]
      %v260 = vld [vmem:[%s166 + $0x154] sm:$0xf]
      %v261 = vld [vmem:[%s166 + $0x158] sm:$0xf]
      %v262 = vld [vmem:[%s166 + $0x15c] sm:$0xf]
      %v263 = vld [vmem:[%s166 + $0x160] sm:$0xf]
      %v264 = vld [vmem:[%s166 + $0x164] sm:$0xf]
      %v265 = vld [vmem:[%s166 + $0x168] sm:$0xf]
      %v266 = vld [vmem:[%s166 + $0x16c] sm:$0xf]
      %v267 = vld [vmem:[%s166 + $0x170] sm:$0xf]
      %v268 = vld [vmem:[%s166 + $0x174] sm:$0xf]
      %v269 = vld [vmem:[%s166 + $0x178] sm:$0xf]
      %v270 = vld [vmem:[%s166 + $0x17c] sm:$0xf]
      %v271 = vld [vmem:[%s166 + $0x180] sm:$0xf]
      %v272 = vld [vmem:[%s166 + $0x184] sm:$0xf]
      %v273 = vld [vmem:[%s166 + $0x188] sm:$0xf]
      %v274 = vld [vmem:[%s166 + $0x18c] sm:$0xf]
      %v275 = vld [vmem:[%s166 + $0x190] sm:$0xf]
      %v276 = vld [vmem:[%s166 + $0x194] sm:$0xf]
      %v277 = vld [vmem:[%s166 + $0x198] sm:$0xf]
      %v278 = vld [vmem:[%s166 + $0x19c] sm:$0xf]
      %v279 = vld [vmem:[%s166 + $0x1a0] sm:$0xf]
      %v280 = vld [vmem:[%s166 + $0x1a4] sm:$0xf]
      %v281 = vld [vmem:[%s166 + $0x1a8] sm:$0xf]
      %v282 = vld [vmem:[%s166 + $0x1ac] sm:$0xf]
      %v283 = vld [vmem:[%s166 + $0x1b0] sm:$0xf]
      %v284 = vld [vmem:[%s166 + $0x1b4] sm:$0xf]
      %v285 = vld [vmem:[%s166 + $0x1b8] sm:$0xf]
      %v286 = vld [vmem:[%s166 + $0x1bc] sm:$0xf]
      %v287 = vld [vmem:[%s166 + $0x1c0] sm:$0xf]
      %v288 = vld [vmem:[%s166 + $0x1c4] sm:$0xf]
      %v289 = vld [vmem:[%s166 + $0x1c8] sm:$0xf]
      %v290 = vld [vmem:[%s166 + $0x1cc] sm:$0xf]
      %v291 = vld [vmem:[%s1] sm:$0xf]
      %v292 = vld [vmem:[%s1 + $0x4] sm:$0xf]
      %v293 = vld [vmem:[%s1 + $0x8] sm:$0xf]
      %v294 = vld [vmem:[%s1 + $0xc] sm:$0xf]
      %v295 = vld [vmem:[%s1 + $0x10] sm:$0x3]
      %v296 = vld [vmem:[%s2] sm:$0x1]
      %v298 = vlaneseq
      %v299 = vshrl.u32 %v298, 7
      %v300 = vsub.s32 0, %v299
      %v301 = vrot.slane %v296, %v300
      %v419 = vunpack.c.l.b16 %v175
      %v420 = vunpack.c.l.b16 %v176
      %v421 = vunpack.c.l.b16 %v177
      %v422 = vunpack.c.l.b16 %v178
      %v423 = vunpack.c.l.b16 %v179
      %v424 = vunpack.c.l.b16 %v180
      %v425 = vunpack.c.l.b16 %v181
      %v426 = vunpack.c.l.b16 %v182
      %v427 = vunpack.c.l.b16 %v183
      %v428 = vunpack.c.l.b16 %v184
      %v429 = vunpack.c.l.b16 %v185
      %v430 = vunpack.c.l.b16 %v186
      %v431 = vunpack.c.l.b16 %v187
      %v432 = vunpack.c.l.b16 %v188
      %v433 = vunpack.c.l.b16 %v189
      %v434 = vunpack.c.l.b16 %v190
      %v435 = vunpack.c.l.b16 %v191
      %v436 = vunpack.c.l.b16 %v192
      %v437 = vunpack.c.l.b16 %v193
      %v438 = vunpack.c.l.b16 %v194
      %v439 = vunpack.c.l.b16 %v195
      %v440 = vunpack.c.l.b16 %v196
      %v441 = vunpack.c.l.b16 %v197
      %v442 = vunpack.c.l.b16 %v198
      %v443 = vunpack.c.l.b16 %v199
      %v444 = vunpack.c.l.b16 %v200
      %v445 = vunpack.c.l.b16 %v201
      %v446 = vunpack.c.l.b16 %v202
      %v447 = vunpack.c.l.b16 %v203
      %v448 = vunpack.c.l.b16 %v204
      %v449 = vunpack.c.l.b16 %v205
      %v450 = vunpack.c.l.b16 %v206
      %v451 = vunpack.c.l.b16 %v207
      %v452 = vunpack.c.l.b16 %v208
      %v453 = vunpack.c.l.b16 %v209
      %v454 = vunpack.c.l.b16 %v210
      %v455 = vunpack.c.l.b16 %v211
      %v456 = vunpack.c.l.b16 %v212
      %v457 = vunpack.c.l.b16 %v213
      %v458 = vunpack.c.l.b16 %v214
      %v459 = vunpack.c.l.b16 %v215
      %v460 = vunpack.c.l.b16 %v216
      %v461 = vunpack.c.l.b16 %v217
      %v462 = vunpack.c.l.b16 %v218
      %v463 = vunpack.c.l.b16 %v219
      %v464 = vunpack.c.l.b16 %v220
      %v465 = vunpack.c.l.b16 %v221
      %v466 = vunpack.c.l.b16 %v222
      %v467 = vunpack.c.l.b16 %v223
      %v468 = vunpack.c.l.b16 %v224
      %v469 = vunpack.c.l.b16 %v225
      %v470 = vunpack.c.l.b16 %v226
      %v471 = vunpack.c.l.b16 %v227
      %v472 = vunpack.c.l.b16 %v228
      %v473 = vunpack.c.l.b16 %v229
      %v474 = vunpack.c.l.b16 %v230
      %v475 = vunpack.c.l.b16 %v231
      %v476 = vunpack.c.l.b16 %v232
      %v477 = vunpack.c.l.b16 %v233
      %v478 = vunpack.c.l.b16 %v234
      %v479 = vunpack.c.l.b16 %v235
      %v480 = vunpack.c.l.b16 %v236
      %v481 = vunpack.c.l.b16 %v237
      %v482 = vunpack.c.l.b16 %v238
      %v483 = vunpack.c.l.b16 %v239
      %v484 = vunpack.c.l.b16 %v240
      %v485 = vunpack.c.l.b16 %v241
      %v486 = vunpack.c.l.b16 %v242
      %v487 = vunpack.c.l.b16 %v243
      %v488 = vunpack.c.l.b16 %v244
      %v489 = vunpack.c.l.b16 %v245
      %v490 = vunpack.c.l.b16 %v246
      %v491 = vunpack.c.l.b16 %v247
      %v492 = vunpack.c.l.b16 %v248
      %v493 = vunpack.c.l.b16 %v249
      %v494 = vunpack.c.l.b16 %v250
      %v495 = vunpack.c.l.b16 %v251
      %v496 = vunpack.c.l.b16 %v252
      %v497 = vunpack.c.l.b16 %v253
      %v498 = vunpack.c.l.b16 %v254
      %v499 = vunpack.c.l.b16 %v255
      %v500 = vunpack.c.l.b16 %v256
      %v501 = vunpack.c.l.b16 %v257
      %v502 = vunpack.c.l.b16 %v258
      %v503 = vunpack.c.l.b16 %v259
      %v504 = vunpack.c.l.b16 %v260
      %v505 = vunpack.c.l.b16 %v261
      %v506 = vunpack.c.l.b16 %v262
      %v507 = vunpack.c.l.b16 %v263
      %v508 = vunpack.c.l.b16 %v264
      %v509 = vunpack.c.l.b16 %v265
      %v510 = vunpack.c.l.b16 %v266
      %v511 = vunpack.c.l.b16 %v267
      %v512 = vunpack.c.l.b16 %v268
      %v513 = vunpack.c.l.b16 %v269
      %v514 = vunpack.c.l.b16 %v270
      %v515 = vunpack.c.l.b16 %v271
      %v516 = vunpack.c.l.b16 %v272
      %v517 = vunpack.c.l.b16 %v273
      %v518 = vunpack.c.l.b16 %v274
      %v519 = vunpack.c.l.b16 %v275
      %v520 = vunpack.c.l.b16 %v276
      %v521 = vunpack.c.l.b16 %v277
      %v522 = vunpack.c.l.b16 %v278
      %v523 = vunpack.c.l.b16 %v279
      %v524 = vunpack.c.l.b16 %v280
      %v525 = vunpack.c.l.b16 %v281
      %v526 = vunpack.c.l.b16 %v282
      %v527 = vunpack.c.l.b16 %v283
      %v528 = vunpack.c.l.b16 %v284
      %v529 = vunpack.c.l.b16 %v285
      %v530 = vunpack.c.l.b16 %v286
      %v531 = vunpack.c.l.b16 %v287
      %v532 = vunpack.c.l.b16 %v288
      %v533 = vunpack.c.l.b16 %v289
      %v534 = vunpack.c.l.b16 %v290
      %v535 = vpack.c.b16 %v420, %v419
      %v536 = vpack.c.b16 %v422, %v421
      %v537 = vpack.c.b16 %v424, %v423
      %v538 = vpack.c.b16 %v426, %v425
      %v539 = vpack.c.b16 %v428, %v427
      %v540 = vpack.c.b16 %v430, %v429
      %v541 = vpack.c.b16 %v432, %v431
      %v542 = vpack.c.b16 %v434, %v433
      %v543 = vpack.c.b16 %v436, %v435
      %v544 = vpack.c.b16 %v438, %v437
      %v545 = vpack.c.b16 %v440, %v439
      %v546 = vpack.c.b16 %v442, %v441
      %v547 = vpack.c.b16 %v444, %v443
      %v548 = vpack.c.b16 %v446, %v445
      %v549 = vpack.c.b16 %v448, %v447
      %v550 = vpack.c.b16 %v450, %v449
      %v551 = vpack.c.b16 %v452, %v451
      %v552 = vpack.c.b16 %v454, %v453
      %v553 = vpack.c.b16 %v456, %v455
      %v554 = vpack.c.b16 %v458, %v457
      %v555 = vpack.c.b16 %v460, %v459
      %v556 = vpack.c.b16 %v462, %v461
      %v557 = vpack.c.b16 %v464, %v463
      %v558 = vpack.c.b16 %v466, %v465
      %v559 = vpack.c.b16 %v468, %v467
      %v560 = vpack.c.b16 %v470, %v469
      %v561 = vpack.c.b16 %v472, %v471
      %v562 = vpack.c.b16 %v474, %v473
      %v563 = vpack.c.b16 %v476, %v475
      %v564 = vpack.c.b16 %v478, %v477
      %v565 = vpack.c.b16 %v480, %v479
      %v566 = vpack.c.b16 %v482, %v481
      %v567 = vpack.c.b16 %v484, %v483
      %v568 = vpack.c.b16 %v486, %v485
      %v569 = vpack.c.b16 %v488, %v487
      %v570 = vpack.c.b16 %v490, %v489
      %v571 = vpack.c.b16 %v492, %v491
      %v572 = vpack.c.b16 %v494, %v493
      %v573 = vpack.c.b16 %v496, %v495
      %v574 = vpack.c.b16 %v498, %v497
      %v575 = vpack.c.b16 %v500, %v499
      %v576 = vpack.c.b16 %v502, %v501
      %v577 = vpack.c.b16 %v504, %v503
      %v578 = vpack.c.b16 %v506, %v505
      %v579 = vpack.c.b16 %v508, %v507
      %v580 = vpack.c.b16 %v510, %v509
      %v581 = vpack.c.b16 %v512, %v511
      %v582 = vpack.c.b16 %v514, %v513
      %v583 = vpack.c.b16 %v516, %v515
      %v584 = vpack.c.b16 %v518, %v517
      %v585 = vpack.c.b16 %v520, %v519
      %v586 = vpack.c.b16 %v522, %v521
      %v587 = vpack.c.b16 %v524, %v523
      %v588 = vpack.c.b16 %v526, %v525
      %v589 = vpack.c.b16 %v528, %v527
      %v590 = vpack.c.b16 %v530, %v529
      %v591 = vpack.c.b16 %v532, %v531
      %v592 = vpack.c.b16 %v534, %v533
      %v598 = vunpack.c.l.b16 %v291
      %v599 = vunpack.c.l.b16 %v292
      %v600 = vunpack.c.l.b16 %v293
      %v601 = vunpack.c.l.b16 %v294
      %v602 = vunpack.c.l.b16 %v295
      %v603 = vpack.c.b16 %v599, %v598
      %v604 = vpack.c.b16 %v601, %v600
      %v605 = vpack.c.b16 %v602, %v602
      %vm608 = vcmask 293888
      %v610 = vsel %vm608, %v535, 0
      %v613 = vsel %vm608, %v536, 0
      %v616 = vsel %vm608, %v537, 0
      %v619 = vsel %vm608, %v538, 0
      %v622 = vsel %vm608, %v539, 0
      %v625 = vsel %vm608, %v540, 0
      %v628 = vsel %vm608, %v541, 0
      %v631 = vsel %vm608, %v542, 0
      %v634 = vsel %vm608, %v543, 0
      %v637 = vsel %vm608, %v544, 0
      %v640 = vsel %vm608, %v545, 0
      %v643 = vsel %vm608, %v546, 0
      %v646 = vsel %vm608, %v547, 0
      %v649 = vsel %vm608, %v548, 0
      %v652 = vsel %vm608, %v549, 0
      %v655 = vsel %vm608, %v550, 0
      %v658 = vsel %vm608, %v551, 0
      %v661 = vsel %vm608, %v552, 0
      %v664 = vsel %vm608, %v553, 0
      %v667 = vsel %vm608, %v554, 0
      %v670 = vsel %vm608, %v555, 0
      %v673 = vsel %vm608, %v556, 0
      %v676 = vsel %vm608, %v557, 0
      %v679 = vsel %vm608, %v558, 0
      %v682 = vsel %vm608, %v559, 0
      %v685 = vsel %vm608, %v560, 0
      %v688 = vsel %vm608, %v561, 0
      %v691 = vsel %vm608, %v562, 0
      %v694 = vsel %vm608, %v563, 0
      %v697 = vsel %vm608, %v564, 0
      %v700 = vsel %vm608, %v565, 0
      %v703 = vsel %vm608, %v566, 0
      %v706 = vsel %vm608, %v567, 0
      %v709 = vsel %vm608, %v568, 0
      %v712 = vsel %vm608, %v569, 0
      %v715 = vsel %vm608, %v570, 0
      %v718 = vsel %vm608, %v571, 0
      %v721 = vsel %vm608, %v572, 0
      %v724 = vsel %vm608, %v573, 0
      %v727 = vsel %vm608, %v574, 0
      %v730 = vsel %vm608, %v575, 0
      %v733 = vsel %vm608, %v576, 0
      %v736 = vsel %vm608, %v577, 0
      %v739 = vsel %vm608, %v578, 0
      %v742 = vsel %vm608, %v579, 0
      %v745 = vsel %vm608, %v580, 0
      %v748 = vsel %vm608, %v581, 0
      %v751 = vsel %vm608, %v582, 0
      %v754 = vsel %vm608, %v583, 0
      %v757 = vsel %vm608, %v584, 0
      %v760 = vsel %vm608, %v585, 0
      %v763 = vsel %vm608, %v586, 0
      %v766 = vsel %vm608, %v587, 0
      %v769 = vsel %vm608, %v588, 0
      %v772 = vsel %vm608, %v589, 0
      %v775 = vsel %vm608, %v590, 0
      %v778 = vsel %vm608, %v591, 0
      %v781 = vsel %vm608, %v592, 0
      %vm783 = vcmask 1041408
      %v785 = vsel %vm783, %v605, 0
      %787 = vmatprep.subr.bf16.mxu0 0
      %788 = vmatpush1.bf16.msra.mxu0 0
      %789 = vmatprep.subr.bf16.mxu0 0
      %790 = vmatpush1.bf16.msra.mxu0 0
      %791 = vmatprep.subr.bf16.mxu0 0
      %792 = vmatpush1.bf16.msra.mxu0 0
      %793 = vmatprep.subr.bf16.mxu0 0
      %794 = vmatpush1.bf16.msra.mxu0 0
      %795 = vmatprep.subr.bf16.mxu0 0
      %796 = vmatpush1.bf16.msra.mxu0 0
      %797 = vmatprep.subr.bf16.mxu0 0
      %798 = vmatpush1.bf16.msra.mxu0 %v785
      %799 = vmatprep.subr.bf16.mxu0 0
      %800 = vmatpush1.bf16.msra.mxu0 %v604
      %801 = vmatprep.subr.bf16.mxu0 0
      %802 = vmatpush1.bf16.msra.mxu0 %v603
      %803 = vmatprep.subr.bf16.mxu0 0
      %804 = vmatpush2.bf16.msra.mxu0 0
      %805 = vmatprep.subr.bf16.mxu0 0
      %806 = vmatpush2.bf16.msra.mxu0 0
      %807 = vmatprep.subr.bf16.mxu0 0
      %808 = vmatpush2.bf16.msra.mxu0 0
      %809 = vmatprep.subr.bf16.mxu0 0
      %810 = vmatpush2.bf16.msra.mxu0 0
      %811 = vmatprep.subr.bf16.mxu0 0
      %812 = vmatpush2.bf16.msra.mxu0 0
      %813 = vmatprep.subr.bf16.mxu0 0
      %814 = vmatpush2.bf16.msra.mxu0 0
      %815 = vmatprep.subr.bf16.mxu0 0
      %816 = vmatpush2.bf16.msra.mxu0 0
      %817 = vmatprep.subr.bf16.mxu0 0
      %818 = vmatpush2.bf16.msra.mxu0 0
      %819 = vmatprep.mubr.bf16.mxu0 0
      %820 = vmatmul.mubr.bf16.gmra.mxu0 %v610
      %v821 = vpop.f32.mrf.mxu0
      %v822 = vadd.f32 %v301, %v821
      %v823 = vpop.f32.mrf.mxu0
      %v824 = vpop.f32.mrf.mxu0
      %v825 = vadd.f32 %v301, %v824
      %v826 = vpop.f32.mrf.mxu0
      %827 = vmatprep.mubr.bf16.mxu0 0
      %828 = vmatmul.mubr.bf16.gmra.mxu0 %v613
      %v829 = vpop.f32.mrf.mxu0
      %v830 = vadd.f32 %v301, %v829
      %v831 = vpop.f32.mrf.mxu0
      %v832 = vpop.f32.mrf.mxu0
      %v833 = vadd.f32 %v301, %v832
      %v834 = vpop.f32.mrf.mxu0
      %835 = vmatprep.mubr.bf16.mxu0 0
      %836 = vmatmul.mubr.bf16.gmra.mxu0 %v616
      %v837 = vpop.f32.mrf.mxu0
      %v838 = vadd.f32 %v301, %v837
      %v839 = vpop.f32.mrf.mxu0
      %v840 = vpop.f32.mrf.mxu0
      %v841 = vadd.f32 %v301, %v840
      %v842 = vpop.f32.mrf.mxu0
      %843 = vmatprep.mubr.bf16.mxu0 0
      %844 = vmatmul.mubr.bf16.gmra.mxu0 %v619
      %v845 = vpop.f32.mrf.mxu0
      %v846 = vadd.f32 %v301, %v845
      %v847 = vpop.f32.mrf.mxu0
      %v848 = vpop.f32.mrf.mxu0
      %v849 = vadd.f32 %v301, %v848
      %v850 = vpop.f32.mrf.mxu0
      %851 = vmatprep.mubr.bf16.mxu0 0
      %852 = vmatmul.mubr.bf16.gmra.mxu0 %v622
      %v853 = vpop.f32.mrf.mxu0
      %v854 = vadd.f32 %v301, %v853
      %v855 = vpop.f32.mrf.mxu0
      %v856 = vpop.f32.mrf.mxu0
      %v857 = vadd.f32 %v301, %v856
      %v858 = vpop.f32.mrf.mxu0
      %859 = vmatprep.mubr.bf16.mxu0 0
      %860 = vmatmul.mubr.bf16.gmra.mxu0 %v625
      %v861 = vpop.f32.mrf.mxu0
      %v862 = vadd.f32 %v301, %v861
      %v863 = vpop.f32.mrf.mxu0
      %v864 = vpop.f32.mrf.mxu0
      %v865 = vadd.f32 %v301, %v864
      %v866 = vpop.f32.mrf.mxu0
      %867 = vmatprep.mubr.bf16.mxu0 0
      %868 = vmatmul.mubr.bf16.gmra.mxu0 %v628
      %v869 = vpop.f32.mrf.mxu0
      %v870 = vadd.f32 %v301, %v869
      %v871 = vpop.f32.mrf.mxu0
      %v872 = vpop.f32.mrf.mxu0
      %v873 = vadd.f32 %v301, %v872
      %v874 = vpop.f32.mrf.mxu0
      %875 = vmatprep.mubr.bf16.mxu0 0
      %876 = vmatmul.mubr.bf16.gmra.mxu0 %v631
      %v877 = vpop.f32.mrf.mxu0
      %v878 = vadd.f32 %v301, %v877
      %v879 = vpop.f32.mrf.mxu0
      %v880 = vpop.f32.mrf.mxu0
      %v881 = vadd.f32 %v301, %v880
      %v882 = vpop.f32.mrf.mxu0
      %883 = vmatprep.mubr.bf16.mxu0 0
      %884 = vmatmul.mubr.bf16.gmra.mxu0 %v634
      %v885 = vpop.f32.mrf.mxu0
      %v886 = vadd.f32 %v301, %v885
      %v887 = vpop.f32.mrf.mxu0
      %v888 = vpop.f32.mrf.mxu0
      %v889 = vadd.f32 %v301, %v888
      %v890 = vpop.f32.mrf.mxu0
      %891 = vmatprep.mubr.bf16.mxu0 0
      %892 = vmatmul.mubr.bf16.gmra.mxu0 %v637
      %v893 = vpop.f32.mrf.mxu0
      %v894 = vadd.f32 %v301, %v893
      %v895 = vpop.f32.mrf.mxu0
      %v896 = vpop.f32.mrf.mxu0
      %v897 = vadd.f32 %v301, %v896
      %v898 = vpop.f32.mrf.mxu0
      %899 = vmatprep.mubr.bf16.mxu0 0
      %900 = vmatmul.mubr.bf16.gmra.mxu0 %v640
      %v901 = vpop.f32.mrf.mxu0
      %v902 = vadd.f32 %v301, %v901
      %v903 = vpop.f32.mrf.mxu0
      %v904 = vpop.f32.mrf.mxu0
      %v905 = vadd.f32 %v301, %v904
      %v906 = vpop.f32.mrf.mxu0
      %907 = vmatprep.mubr.bf16.mxu0 0
      %908 = vmatmul.mubr.bf16.gmra.mxu0 %v643
      %v909 = vpop.f32.mrf.mxu0
      %v910 = vadd.f32 %v301, %v909
      %v911 = vpop.f32.mrf.mxu0
      %v912 = vpop.f32.mrf.mxu0
      %v913 = vadd.f32 %v301, %v912
      %v914 = vpop.f32.mrf.mxu0
      %915 = vmatprep.mubr.bf16.mxu0 0
      %916 = vmatmul.mubr.bf16.gmra.mxu0 %v646
      %v917 = vpop.f32.mrf.mxu0
      %v918 = vadd.f32 %v301, %v917
      %v919 = vpop.f32.mrf.mxu0
      %v920 = vpop.f32.mrf.mxu0
      %v921 = vadd.f32 %v301, %v920
      %v922 = vpop.f32.mrf.mxu0
      %923 = vmatprep.mubr.bf16.mxu0 0
      %924 = vmatmul.mubr.bf16.gmra.mxu0 %v649
      %v925 = vpop.f32.mrf.mxu0
      %v926 = vadd.f32 %v301, %v925
      %v927 = vpop.f32.mrf.mxu0
      %v928 = vpop.f32.mrf.mxu0
      %v929 = vadd.f32 %v301, %v928
      %v930 = vpop.f32.mrf.mxu0
      %931 = vmatprep.mubr.bf16.mxu0 0
      %932 = vmatmul.mubr.bf16.gmra.mxu0 %v652
      %v933 = vpop.f32.mrf.mxu0
      %v934 = vadd.f32 %v301, %v933
      %v935 = vpop.f32.mrf.mxu0
      %v936 = vpop.f32.mrf.mxu0
      %v937 = vadd.f32 %v301, %v936
      %v938 = vpop.f32.mrf.mxu0
      %939 = vmatprep.mubr.bf16.mxu0 0
      %940 = vmatmul.mubr.bf16.gmra.mxu0 %v655
      %v941 = vpop.f32.mrf.mxu0
      %v942 = vadd.f32 %v301, %v941
      %v943 = vpop.f32.mrf.mxu0
      %v944 = vpop.f32.mrf.mxu0
      %v945 = vadd.f32 %v301, %v944
      %v946 = vpop.f32.mrf.mxu0
      %947 = vmatprep.mubr.bf16.mxu0 0
      %948 = vmatmul.mubr.bf16.gmra.mxu0 %v658
      %v949 = vpop.f32.mrf.mxu0
      %v950 = vadd.f32 %v301, %v949
      %v951 = vpop.f32.mrf.mxu0
      %v952 = vpop.f32.mrf.mxu0
      %v953 = vadd.f32 %v301, %v952
      %v954 = vpop.f32.mrf.mxu0
      %955 = vmatprep.mubr.bf16.mxu0 0
      %956 = vmatmul.mubr.bf16.gmra.mxu0 %v661
      %v957 = vpop.f32.mrf.mxu0
      %v958 = vadd.f32 %v301, %v957
      %v959 = vpop.f32.mrf.mxu0
      %v960 = vpop.f32.mrf.mxu0
      %v961 = vadd.f32 %v301, %v960
      %v962 = vpop.f32.mrf.mxu0
      %963 = vmatprep.mubr.bf16.mxu0 0
      %964 = vmatmul.mubr.bf16.gmra.mxu0 %v664
      %v965 = vpop.f32.mrf.mxu0
      %v966 = vadd.f32 %v301, %v965
      %v967 = vpop.f32.mrf.mxu0
      %v968 = vpop.f32.mrf.mxu0
      %v969 = vadd.f32 %v301, %v968
      %v970 = vpop.f32.mrf.mxu0
      %971 = vmatprep.mubr.bf16.mxu0 0
      %972 = vmatmul.mubr.bf16.gmra.mxu0 %v667
      %v973 = vpop.f32.mrf.mxu0
      %v974 = vadd.f32 %v301, %v973
      %v975 = vpop.f32.mrf.mxu0
      %v976 = vpop.f32.mrf.mxu0
      %v977 = vadd.f32 %v301, %v976
      %v978 = vpop.f32.mrf.mxu0
      %979 = vmatprep.mubr.bf16.mxu0 0
      %980 = vmatmul.mubr.bf16.gmra.mxu0 %v670
      %v981 = vpop.f32.mrf.mxu0
      %v982 = vadd.f32 %v301, %v981
      %v983 = vpop.f32.mrf.mxu0
      %v984 = vpop.f32.mrf.mxu0
      %v985 = vadd.f32 %v301, %v984
      %v986 = vpop.f32.mrf.mxu0
      %987 = vmatprep.mubr.bf16.mxu0 0
      %988 = vmatmul.mubr.bf16.gmra.mxu0 %v673
      %v989 = vpop.f32.mrf.mxu0
      %v990 = vadd.f32 %v301, %v989
      %v991 = vpop.f32.mrf.mxu0
      %v992 = vpop.f32.mrf.mxu0
      %v993 = vadd.f32 %v301, %v992
      %v994 = vpop.f32.mrf.mxu0
      %995 = vmatprep.mubr.bf16.mxu0 0
      %996 = vmatmul.mubr.bf16.gmra.mxu0 %v676
      %v997 = vpop.f32.mrf.mxu0
      %v998 = vadd.f32 %v301, %v997
      %v999 = vpop.f32.mrf.mxu0
      %v1000 = vpop.f32.mrf.mxu0
      %v1001 = vadd.f32 %v301, %v1000
      %v1002 = vpop.f32.mrf.mxu0
      %1003 = vmatprep.mubr.bf16.mxu0 0
      %1004 = vmatmul.mubr.bf16.gmra.mxu0 %v679
      %v1005 = vpop.f32.mrf.mxu0
      %v1006 = vadd.f32 %v301, %v1005
      %v1007 = vpop.f32.mrf.mxu0
      %v1008 = vpop.f32.mrf.mxu0
      %v1009 = vadd.f32 %v301, %v1008
      %v1010 = vpop.f32.mrf.mxu0
      %1011 = vmatprep.mubr.bf16.mxu0 0
      %1012 = vmatmul.mubr.bf16.gmra.mxu0 %v682
      %v1013 = vpop.f32.mrf.mxu0
      %v1014 = vadd.f32 %v301, %v1013
      %v1015 = vpop.f32.mrf.mxu0
      %v1016 = vpop.f32.mrf.mxu0
      %v1017 = vadd.f32 %v301, %v1016
      %v1018 = vpop.f32.mrf.mxu0
      %1019 = vmatprep.mubr.bf16.mxu0 0
      %1020 = vmatmul.mubr.bf16.gmra.mxu0 %v685
      %v1021 = vpop.f32.mrf.mxu0
      %v1022 = vadd.f32 %v301, %v1021
      %v1023 = vpop.f32.mrf.mxu0
      %v1024 = vpop.f32.mrf.mxu0
      %v1025 = vadd.f32 %v301, %v1024
      %v1026 = vpop.f32.mrf.mxu0
      %1027 = vmatprep.mubr.bf16.mxu0 0
      %1028 = vmatmul.mubr.bf16.gmra.mxu0 %v688
      %v1029 = vpop.f32.mrf.mxu0
      %v1030 = vadd.f32 %v301, %v1029
      %v1031 = vpop.f32.mrf.mxu0
      %v1032 = vpop.f32.mrf.mxu0
      %v1033 = vadd.f32 %v301, %v1032
      %v1034 = vpop.f32.mrf.mxu0
      %1035 = vmatprep.mubr.bf16.mxu0 0
      %1036 = vmatmul.mubr.bf16.gmra.mxu0 %v691
      %v1037 = vpop.f32.mrf.mxu0
      %v1038 = vadd.f32 %v301, %v1037
      %v1039 = vpop.f32.mrf.mxu0
      %v1040 = vpop.f32.mrf.mxu0
      %v1041 = vadd.f32 %v301, %v1040
      %v1042 = vpop.f32.mrf.mxu0
      %1043 = vmatprep.mubr.bf16.mxu0 0
      %1044 = vmatmul.mubr.bf16.gmra.mxu0 %v694
      %v1045 = vpop.f32.mrf.mxu0
      %v1046 = vadd.f32 %v301, %v1045
      %v1047 = vpop.f32.mrf.mxu0
      %v1048 = vpop.f32.mrf.mxu0
      %v1049 = vadd.f32 %v301, %v1048
      %v1050 = vpop.f32.mrf.mxu0
      %1051 = vmatprep.mubr.bf16.mxu0 0
      %1052 = vmatmul.mubr.bf16.gmra.mxu0 %v697
      %v1053 = vpop.f32.mrf.mxu0
      %v1054 = vadd.f32 %v301, %v1053
      %v1055 = vpop.f32.mrf.mxu0
      %v1056 = vpop.f32.mrf.mxu0
      %v1057 = vadd.f32 %v301, %v1056
      %v1058 = vpop.f32.mrf.mxu0
      %1059 = vmatprep.mubr.bf16.mxu0 0
      %1060 = vmatmul.mubr.bf16.gmra.mxu0 %v700
      %v1061 = vpop.f32.mrf.mxu0
      %v1062 = vadd.f32 %v301, %v1061
      %v1063 = vpop.f32.mrf.mxu0
      %v1064 = vpop.f32.mrf.mxu0
      %v1065 = vadd.f32 %v301, %v1064
      %v1066 = vpop.f32.mrf.mxu0
      %1067 = vmatprep.mubr.bf16.mxu0 0
      %1068 = vmatmul.mubr.bf16.gmra.mxu0 %v703
      %v1069 = vpop.f32.mrf.mxu0
      %v1070 = vadd.f32 %v301, %v1069
      %v1071 = vpop.f32.mrf.mxu0
      %v1072 = vpop.f32.mrf.mxu0
      %v1073 = vadd.f32 %v301, %v1072
      %v1074 = vpop.f32.mrf.mxu0
      %1075 = vmatprep.mubr.bf16.mxu0 0
      %1076 = vmatmul.mubr.bf16.gmra.mxu0 %v706
      %v1077 = vpop.f32.mrf.mxu0
      %v1078 = vadd.f32 %v301, %v1077
      %v1079 = vpop.f32.mrf.mxu0
      %v1080 = vpop.f32.mrf.mxu0
      %v1081 = vadd.f32 %v301, %v1080
      %v1082 = vpop.f32.mrf.mxu0
      %1083 = vmatprep.mubr.bf16.mxu0 0
      %1084 = vmatmul.mubr.bf16.gmra.mxu0 %v709
      %v1085 = vpop.f32.mrf.mxu0
      %v1086 = vadd.f32 %v301, %v1085
      %v1087 = vpop.f32.mrf.mxu0
      %v1088 = vpop.f32.mrf.mxu0
      %v1089 = vadd.f32 %v301, %v1088
      %v1090 = vpop.f32.mrf.mxu0
      %1091 = vmatprep.mubr.bf16.mxu0 0
      %1092 = vmatmul.mubr.bf16.gmra.mxu0 %v712
      %v1093 = vpop.f32.mrf.mxu0
      %v1094 = vadd.f32 %v301, %v1093
      %v1095 = vpop.f32.mrf.mxu0
      %v1096 = vpop.f32.mrf.mxu0
      %v1097 = vadd.f32 %v301, %v1096
      %v1098 = vpop.f32.mrf.mxu0
      %1099 = vmatprep.mubr.bf16.mxu0 0
      %1100 = vmatmul.mubr.bf16.gmra.mxu0 %v715
      %v1101 = vpop.f32.mrf.mxu0
      %v1102 = vadd.f32 %v301, %v1101
      %v1103 = vpop.f32.mrf.mxu0
      %v1104 = vpop.f32.mrf.mxu0
      %v1105 = vadd.f32 %v301, %v1104
      %v1106 = vpop.f32.mrf.mxu0
      %1107 = vmatprep.mubr.bf16.mxu0 0
      %1108 = vmatmul.mubr.bf16.gmra.mxu0 %v718
      %v1109 = vpop.f32.mrf.mxu0
      %v1110 = vadd.f32 %v301, %v1109
      %v1111 = vpop.f32.mrf.mxu0
      %v1112 = vpop.f32.mrf.mxu0
      %v1113 = vadd.f32 %v301, %v1112
      %v1114 = vpop.f32.mrf.mxu0
      %1115 = vmatprep.mubr.bf16.mxu0 0
      %1116 = vmatmul.mubr.bf16.gmra.mxu0 %v721
      %v1117 = vpop.f32.mrf.mxu0
      %v1118 = vadd.f32 %v301, %v1117
      %v1119 = vpop.f32.mrf.mxu0
      %v1120 = vpop.f32.mrf.mxu0
      %v1121 = vadd.f32 %v301, %v1120
      %v1122 = vpop.f32.mrf.mxu0
      %1123 = vmatprep.mubr.bf16.mxu0 0
      %1124 = vmatmul.mubr.bf16.gmra.mxu0 %v724
      %v1125 = vpop.f32.mrf.mxu0
      %v1126 = vadd.f32 %v301, %v1125
      %v1127 = vpop.f32.mrf.mxu0
      %v1128 = vpop.f32.mrf.mxu0
      %v1129 = vadd.f32 %v301, %v1128
      %v1130 = vpop.f32.mrf.mxu0
      %1131 = vmatprep.mubr.bf16.mxu0 0
      %1132 = vmatmul.mubr.bf16.gmra.mxu0 %v727
      %v1133 = vpop.f32.mrf.mxu0
      %v1134 = vadd.f32 %v301, %v1133
      %v1135 = vpop.f32.mrf.mxu0
      %v1136 = vpop.f32.mrf.mxu0
      %v1137 = vadd.f32 %v301, %v1136
      %v1138 = vpop.f32.mrf.mxu0
      %1139 = vmatprep.mubr.bf16.mxu0 0
      %1140 = vmatmul.mubr.bf16.gmra.mxu0 %v730
      %v1141 = vpop.f32.mrf.mxu0
      %v1142 = vadd.f32 %v301, %v1141
      %v1143 = vpop.f32.mrf.mxu0
      %v1144 = vpop.f32.mrf.mxu0
      %v1145 = vadd.f32 %v301, %v1144
      %v1146 = vpop.f32.mrf.mxu0
      %1147 = vmatprep.mubr.bf16.mxu0 0
      %1148 = vmatmul.mubr.bf16.gmra.mxu0 %v733
      %v1149 = vpop.f32.mrf.mxu0
      %v1150 = vadd.f32 %v301, %v1149
      %v1151 = vpop.f32.mrf.mxu0
      %v1152 = vpop.f32.mrf.mxu0
      %v1153 = vadd.f32 %v301, %v1152
      %v1154 = vpop.f32.mrf.mxu0
      %1155 = vmatprep.mubr.bf16.mxu0 0
      %1156 = vmatmul.mubr.bf16.gmra.mxu0 %v736
      %v1157 = vpop.f32.mrf.mxu0
      %v1158 = vadd.f32 %v301, %v1157
      %v1159 = vpop.f32.mrf.mxu0
      %v1160 = vpop.f32.mrf.mxu0
      %v1161 = vadd.f32 %v301, %v1160
      %v1162 = vpop.f32.mrf.mxu0
      %1163 = vmatprep.mubr.bf16.mxu0 0
      %1164 = vmatmul.mubr.bf16.gmra.mxu0 %v739
      %v1165 = vpop.f32.mrf.mxu0
      %v1166 = vadd.f32 %v301, %v1165
      %v1167 = vpop.f32.mrf.mxu0
      %v1168 = vpop.f32.mrf.mxu0
      %v1169 = vadd.f32 %v301, %v1168
      %v1170 = vpop.f32.mrf.mxu0
      %1171 = vmatprep.mubr.bf16.mxu0 0
      %1172 = vmatmul.mubr.bf16.gmra.mxu0 %v742
      %v1173 = vpop.f32.mrf.mxu0
      %v1174 = vadd.f32 %v301, %v1173
      %v1175 = vpop.f32.mrf.mxu0
      %v1176 = vpop.f32.mrf.mxu0
      %v1177 = vadd.f32 %v301, %v1176
      %v1178 = vpop.f32.mrf.mxu0
      %1179 = vmatprep.mubr.bf16.mxu0 0
      %1180 = vmatmul.mubr.bf16.gmra.mxu0 %v745
      %v1181 = vpop.f32.mrf.mxu0
      %v1182 = vadd.f32 %v301, %v1181
      %v1183 = vpop.f32.mrf.mxu0
      %v1184 = vpop.f32.mrf.mxu0
      %v1185 = vadd.f32 %v301, %v1184
      %v1186 = vpop.f32.mrf.mxu0
      %1187 = vmatprep.mubr.bf16.mxu0 0
      %1188 = vmatmul.mubr.bf16.gmra.mxu0 %v748
      %v1189 = vpop.f32.mrf.mxu0
      %v1190 = vadd.f32 %v301, %v1189
      %v1191 = vpop.f32.mrf.mxu0
      %v1192 = vpop.f32.mrf.mxu0
      %v1193 = vadd.f32 %v301, %v1192
      %v1194 = vpop.f32.mrf.mxu0
      %1195 = vmatprep.mubr.bf16.mxu0 0
      %1196 = vmatmul.mubr.bf16.gmra.mxu0 %v751
      %v1197 = vpop.f32.mrf.mxu0
      %v1198 = vadd.f32 %v301, %v1197
      %v1199 = vpop.f32.mrf.mxu0
      %v1200 = vpop.f32.mrf.mxu0
      %v1201 = vadd.f32 %v301, %v1200
      %v1202 = vpop.f32.mrf.mxu0
      %1203 = vmatprep.mubr.bf16.mxu0 0
      %1204 = vmatmul.mubr.bf16.gmra.mxu0 %v754
      %v1205 = vpop.f32.mrf.mxu0
      %v1206 = vadd.f32 %v301, %v1205
      %v1207 = vpop.f32.mrf.mxu0
      %v1208 = vpop.f32.mrf.mxu0
      %v1209 = vadd.f32 %v301, %v1208
      %v1210 = vpop.f32.mrf.mxu0
      %1211 = vmatprep.mubr.bf16.mxu0 0
      %1212 = vmatmul.mubr.bf16.gmra.mxu0 %v757
      %v1213 = vpop.f32.mrf.mxu0
      %v1214 = vadd.f32 %v301, %v1213
      %v1215 = vpop.f32.mrf.mxu0
      %v1216 = vpop.f32.mrf.mxu0
      %v1217 = vadd.f32 %v301, %v1216
      %v1218 = vpop.f32.mrf.mxu0
      %1219 = vmatprep.mubr.bf16.mxu0 0
      %1220 = vmatmul.mubr.bf16.gmra.mxu0 %v760
      %v1221 = vpop.f32.mrf.mxu0
      %v1222 = vadd.f32 %v301, %v1221
      %v1223 = vpop.f32.mrf.mxu0
      %v1224 = vpop.f32.mrf.mxu0
      %v1225 = vadd.f32 %v301, %v1224
      %v1226 = vpop.f32.mrf.mxu0
      %1227 = vmatprep.mubr.bf16.mxu0 0
      %1228 = vmatmul.mubr.bf16.gmra.mxu0 %v763
      %v1229 = vpop.f32.mrf.mxu0
      %v1230 = vadd.f32 %v301, %v1229
      %v1231 = vpop.f32.mrf.mxu0
      %v1232 = vpop.f32.mrf.mxu0
      %v1233 = vadd.f32 %v301, %v1232
      %v1234 = vpop.f32.mrf.mxu0
      %1235 = vmatprep.mubr.bf16.mxu0 0
      %1236 = vmatmul.mubr.bf16.gmra.mxu0 %v766
      %v1237 = vpop.f32.mrf.mxu0
      %v1238 = vadd.f32 %v301, %v1237
      %v1239 = vpop.f32.mrf.mxu0
      %v1240 = vpop.f32.mrf.mxu0
      %v1241 = vadd.f32 %v301, %v1240
      %v1242 = vpop.f32.mrf.mxu0
      %1243 = vmatprep.mubr.bf16.mxu0 0
      %1244 = vmatmul.mubr.bf16.gmra.mxu0 %v769
      %v1245 = vpop.f32.mrf.mxu0
      %v1246 = vadd.f32 %v301, %v1245
      %v1247 = vpop.f32.mrf.mxu0
      %v1248 = vpop.f32.mrf.mxu0
      %v1249 = vadd.f32 %v301, %v1248
      %v1250 = vpop.f32.mrf.mxu0
      %1251 = vmatprep.mubr.bf16.mxu0 0
      %1252 = vmatmul.mubr.bf16.gmra.mxu0 %v772
      %v1253 = vpop.f32.mrf.mxu0
      %v1254 = vadd.f32 %v301, %v1253
      %v1255 = vpop.f32.mrf.mxu0
      %v1256 = vpop.f32.mrf.mxu0
      %v1257 = vadd.f32 %v301, %v1256
      %v1258 = vpop.f32.mrf.mxu0
      %1259 = vmatprep.mubr.bf16.mxu0 0
      %1260 = vmatmul.mubr.bf16.gmra.mxu0 %v775
      %v1261 = vpop.f32.mrf.mxu0
      %v1262 = vadd.f32 %v301, %v1261
      %v1263 = vpop.f32.mrf.mxu0
      %v1264 = vpop.f32.mrf.mxu0
      %v1265 = vadd.f32 %v301, %v1264
      %v1266 = vpop.f32.mrf.mxu0
      %1267 = vmatprep.mubr.bf16.mxu0 0
      %1268 = vmatmul.mubr.bf16.gmra.mxu0 %v778
      %v1269 = vpop.f32.mrf.mxu0
      %v1270 = vadd.f32 %v301, %v1269
      %v1271 = vpop.f32.mrf.mxu0
      %v1272 = vpop.f32.mrf.mxu0
      %v1273 = vadd.f32 %v301, %v1272
      %v1274 = vpop.f32.mrf.mxu0
      %1275 = vmatprep.mubr.bf16.mxu0 0
      %1276 = vmatmul.mubr.bf16.gmra.mxu0 %v781
      %v1277 = vpop.f32.mrf.mxu0
      %v1278 = vadd.f32 %v301, %v1277
      %v1279 = vpop.f32.mrf.mxu0
      %v1280 = vpop.f32.mrf.mxu0
      %v1281 = vadd.f32 %v301, %v1280
      %v1282 = vpop.f32.mrf.mxu0
      %1283 = vdwg.mxu0
      %v1284 = vmax.f32 %v822, 0.0
      %v1285 = vmax.f32 %v825, 0.0
      %v1286 = vmax.f32 %v830, 0.0
      %v1287 = vmax.f32 %v833, 0.0
      %v1288 = vmax.f32 %v838, 0.0
      %v1289 = vmax.f32 %v841, 0.0
      %v1290 = vmax.f32 %v846, 0.0
      %v1291 = vmax.f32 %v849, 0.0
      %v1292 = vmax.f32 %v854, 0.0
      %v1293 = vmax.f32 %v857, 0.0
      %v1294 = vmax.f32 %v862, 0.0
      %v1295 = vmax.f32 %v865, 0.0
      %v1296 = vmax.f32 %v870, 0.0
      %v1297 = vmax.f32 %v873, 0.0
      %v1298 = vmax.f32 %v878, 0.0
      %v1299 = vmax.f32 %v881, 0.0
      %v1300 = vmax.f32 %v886, 0.0
      %v1301 = vmax.f32 %v889, 0.0
      %v1302 = vmax.f32 %v894, 0.0
      %v1303 = vmax.f32 %v897, 0.0
      %v1304 = vmax.f32 %v902, 0.0
      %v1305 = vmax.f32 %v905, 0.0
      %v1306 = vmax.f32 %v910, 0.0
      %v1307 = vmax.f32 %v913, 0.0
      %v1308 = vmax.f32 %v918, 0.0
      %v1309 = vmax.f32 %v921, 0.0
      %v1310 = vmax.f32 %v926, 0.0
      %v1311 = vmax.f32 %v929, 0.0
      %v1312 = vmax.f32 %v934, 0.0
      %v1313 = vmax.f32 %v937, 0.0
      %v1314 = vmax.f32 %v942, 0.0
      %v1315 = vmax.f32 %v945, 0.0
      %v1316 = vmax.f32 %v950, 0.0
      %v1317 = vmax.f32 %v953, 0.0
      %v1318 = vmax.f32 %v958, 0.0
      %v1319 = vmax.f32 %v961, 0.0
      %v1320 = vmax.f32 %v966, 0.0
      %v1321 = vmax.f32 %v969, 0.0
      %v1322 = vmax.f32 %v974, 0.0
      %v1323 = vmax.f32 %v977, 0.0
      %v1324 = vmax.f32 %v982, 0.0
      %v1325 = vmax.f32 %v985, 0.0
      %v1326 = vmax.f32 %v990, 0.0
      %v1327 = vmax.f32 %v993, 0.0
      %v1328 = vmax.f32 %v998, 0.0
      %v1329 = vmax.f32 %v1001, 0.0
      %v1330 = vmax.f32 %v1006, 0.0
      %v1331 = vmax.f32 %v1009, 0.0
      %v1332 = vmax.f32 %v1014, 0.0
      %v1333 = vmax.f32 %v1017, 0.0
      %v1334 = vmax.f32 %v1022, 0.0
      %v1335 = vmax.f32 %v1025, 0.0
      %v1336 = vmax.f32 %v1030, 0.0
      %v1337 = vmax.f32 %v1033, 0.0
      %v1338 = vmax.f32 %v1038, 0.0
      %v1339 = vmax.f32 %v1041, 0.0
      %v1340 = vmax.f32 %v1046, 0.0
      %v1341 = vmax.f32 %v1049, 0.0
      %v1342 = vmax.f32 %v1054, 0.0
      %v1343 = vmax.f32 %v1057, 0.0
      %v1344 = vmax.f32 %v1062, 0.0
      %v1345 = vmax.f32 %v1065, 0.0
      %v1346 = vmax.f32 %v1070, 0.0
      %v1347 = vmax.f32 %v1073, 0.0
      %v1348 = vmax.f32 %v1078, 0.0
      %v1349 = vmax.f32 %v1081, 0.0
      %v1350 = vmax.f32 %v1086, 0.0
      %v1351 = vmax.f32 %v1089, 0.0
      %v1352 = vmax.f32 %v1094, 0.0
      %v1353 = vmax.f32 %v1097, 0.0
      %v1354 = vmax.f32 %v1102, 0.0
      %v1355 = vmax.f32 %v1105, 0.0
      %v1356 = vmax.f32 %v1110, 0.0
      %v1357 = vmax.f32 %v1113, 0.0
      %v1358 = vmax.f32 %v1118, 0.0
      %v1359 = vmax.f32 %v1121, 0.0
      %v1360 = vmax.f32 %v1126, 0.0
      %v1361 = vmax.f32 %v1129, 0.0
      %v1362 = vmax.f32 %v1134, 0.0
      %v1363 = vmax.f32 %v1137, 0.0
      %v1364 = vmax.f32 %v1142, 0.0
      %v1365 = vmax.f32 %v1145, 0.0
      %v1366 = vmax.f32 %v1150, 0.0
      %v1367 = vmax.f32 %v1153, 0.0
      %v1368 = vmax.f32 %v1158, 0.0
      %v1369 = vmax.f32 %v1161, 0.0
      %v1370 = vmax.f32 %v1166, 0.0
      %v1371 = vmax.f32 %v1169, 0.0
      %v1372 = vmax.f32 %v1174, 0.0
      %v1373 = vmax.f32 %v1177, 0.0
      %v1374 = vmax.f32 %v1182, 0.0
      %v1375 = vmax.f32 %v1185, 0.0
      %v1376 = vmax.f32 %v1190, 0.0
      %v1377 = vmax.f32 %v1193, 0.0
      %v1378 = vmax.f32 %v1198, 0.0
      %v1379 = vmax.f32 %v1201, 0.0
      %v1380 = vmax.f32 %v1206, 0.0
      %v1381 = vmax.f32 %v1209, 0.0
      %v1382 = vmax.f32 %v1214, 0.0
      %v1383 = vmax.f32 %v1217, 0.0
      %v1384 = vmax.f32 %v1222, 0.0
      %v1385 = vmax.f32 %v1225, 0.0
      %v1386 = vmax.f32 %v1230, 0.0
      %v1387 = vmax.f32 %v1233, 0.0
      %v1388 = vmax.f32 %v1238, 0.0
      %v1389 = vmax.f32 %v1241, 0.0
      %v1390 = vmax.f32 %v1246, 0.0
      %v1391 = vmax.f32 %v1249, 0.0
      %v1392 = vmax.f32 %v1254, 0.0
      %v1393 = vmax.f32 %v1257, 0.0
      %v1394 = vmax.f32 %v1262, 0.0
      %v1395 = vmax.f32 %v1265, 0.0
      %v1396 = vmax.f32 %v1270, 0.0
      %v1397 = vmax.f32 %v1273, 0.0
      %v1398 = vmax.f32 %v1278, 0.0
      %v1399 = vmax.f32 %v1281, 0.0
      %v1400 = vpack.c.bf16 %v1285, %v1284
      %v1401 = vpack.c.bf16 %v1287, %v1286
      %v1402 = vpack.c.bf16 %v1289, %v1288
      %v1403 = vpack.c.bf16 %v1291, %v1290
      %v1404 = vpack.c.bf16 %v1293, %v1292
      %v1405 = vpack.c.bf16 %v1295, %v1294
      %v1406 = vpack.c.bf16 %v1297, %v1296
      %v1407 = vpack.c.bf16 %v1299, %v1298
      %v1408 = vpack.c.bf16 %v1301, %v1300
      %v1409 = vpack.c.bf16 %v1303, %v1302
      %v1410 = vpack.c.bf16 %v1305, %v1304
      %v1411 = vpack.c.bf16 %v1307, %v1306
      %v1412 = vpack.c.bf16 %v1309, %v1308
      %v1413 = vpack.c.bf16 %v1311, %v1310
      %v1414 = vpack.c.bf16 %v1313, %v1312
      %v1415 = vpack.c.bf16 %v1315, %v1314
      %v1416 = vpack.c.bf16 %v1317, %v1316
      %v1417 = vpack.c.bf16 %v1319, %v1318
      %v1418 = vpack.c.bf16 %v1321, %v1320
      %v1419 = vpack.c.bf16 %v1323, %v1322
      %v1420 = vpack.c.bf16 %v1325, %v1324
      %v1421 = vpack.c.bf16 %v1327, %v1326
      %v1422 = vpack.c.bf16 %v1329, %v1328
      %v1423 = vpack.c.bf16 %v1331, %v1330
      %v1424 = vpack.c.bf16 %v1333, %v1332
      %v1425 = vpack.c.bf16 %v1335, %v1334
      %v1426 = vpack.c.bf16 %v1337, %v1336
      %v1427 = vpack.c.bf16 %v1339, %v1338
      %v1428 = vpack.c.bf16 %v1341, %v1340
      %v1429 = vpack.c.bf16 %v1343, %v1342
      %v1430 = vpack.c.bf16 %v1345, %v1344
      %v1431 = vpack.c.bf16 %v1347, %v1346
      %v1432 = vpack.c.bf16 %v1349, %v1348
      %v1433 = vpack.c.bf16 %v1351, %v1350
      %v1434 = vpack.c.bf16 %v1353, %v1352
      %v1435 = vpack.c.bf16 %v1355, %v1354
      %v1436 = vpack.c.bf16 %v1357, %v1356
      %v1437 = vpack.c.bf16 %v1359, %v1358
      %v1438 = vpack.c.bf16 %v1361, %v1360
      %v1439 = vpack.c.bf16 %v1363, %v1362
      %v1440 = vpack.c.bf16 %v1365, %v1364
      %v1441 = vpack.c.bf16 %v1367, %v1366
      %v1442 = vpack.c.bf16 %v1369, %v1368
      %v1443 = vpack.c.bf16 %v1371, %v1370
      %v1444 = vpack.c.bf16 %v1373, %v1372
      %v1445 = vpack.c.bf16 %v1375, %v1374
      %v1446 = vpack.c.bf16 %v1377, %v1376
      %v1447 = vpack.c.bf16 %v1379, %v1378
      %v1448 = vpack.c.bf16 %v1381, %v1380
      %v1449 = vpack.c.bf16 %v1383, %v1382
      %v1450 = vpack.c.bf16 %v1385, %v1384
      %v1451 = vpack.c.bf16 %v1387, %v1386
      %v1452 = vpack.c.bf16 %v1389, %v1388
      %v1453 = vpack.c.bf16 %v1391, %v1390
      %v1454 = vpack.c.bf16 %v1393, %v1392
      %v1455 = vpack.c.bf16 %v1395, %v1394
      %v1456 = vpack.c.bf16 %v1397, %v1396
      %v1457 = vpack.c.bf16 %v1399, %v1398
      %v1516 = vunpack.c.l.b16 %v1400
      %v1517 = vunpack.c.h.b16 %v1400
      %v1518 = vunpack.c.l.b16 %v1401
      %v1519 = vunpack.c.h.b16 %v1401
      %v1520 = vunpack.c.l.b16 %v1402
      %v1521 = vunpack.c.h.b16 %v1402
      %v1522 = vunpack.c.l.b16 %v1403
      %v1523 = vunpack.c.h.b16 %v1403
      %v1524 = vunpack.c.l.b16 %v1404
      %v1525 = vunpack.c.h.b16 %v1404
      %v1526 = vunpack.c.l.b16 %v1405
      %v1527 = vunpack.c.h.b16 %v1405
      %v1528 = vunpack.c.l.b16 %v1406
      %v1529 = vunpack.c.h.b16 %v1406
      %v1530 = vunpack.c.l.b16 %v1407
      %v1531 = vunpack.c.h.b16 %v1407
      %v1532 = vunpack.c.l.b16 %v1408
      %v1533 = vunpack.c.h.b16 %v1408
      %v1534 = vunpack.c.l.b16 %v1409
      %v1535 = vunpack.c.h.b16 %v1409
      %v1536 = vunpack.c.l.b16 %v1410
      %v1537 = vunpack.c.h.b16 %v1410
      %v1538 = vunpack.c.l.b16 %v1411
      %v1539 = vunpack.c.h.b16 %v1411
      %v1540 = vunpack.c.l.b16 %v1412
      %v1541 = vunpack.c.h.b16 %v1412
      %v1542 = vunpack.c.l.b16 %v1413
      %v1543 = vunpack.c.h.b16 %v1413
      %v1544 = vunpack.c.l.b16 %v1414
      %v1545 = vunpack.c.h.b16 %v1414
      %v1546 = vunpack.c.l.b16 %v1415
      %v1547 = vunpack.c.h.b16 %v1415
      %v1548 = vunpack.c.l.b16 %v1416
      %v1549 = vunpack.c.h.b16 %v1416
      %v1550 = vunpack.c.l.b16 %v1417
      %v1551 = vunpack.c.h.b16 %v1417
      %v1552 = vunpack.c.l.b16 %v1418
      %v1553 = vunpack.c.h.b16 %v1418
      %v1554 = vunpack.c.l.b16 %v1419
      %v1555 = vunpack.c.h.b16 %v1419
      %v1556 = vunpack.c.l.b16 %v1420
      %v1557 = vunpack.c.h.b16 %v1420
      %v1558 = vunpack.c.l.b16 %v1421
      %v1559 = vunpack.c.h.b16 %v1421
      %v1560 = vunpack.c.l.b16 %v1422
      %v1561 = vunpack.c.h.b16 %v1422
      %v1562 = vunpack.c.l.b16 %v1423
      %v1563 = vunpack.c.h.b16 %v1423
      %v1564 = vunpack.c.l.b16 %v1424
      %v1565 = vunpack.c.h.b16 %v1424
      %v1566 = vunpack.c.l.b16 %v1425
      %v1567 = vunpack.c.h.b16 %v1425
      %v1568 = vunpack.c.l.b16 %v1426
      %v1569 = vunpack.c.h.b16 %v1426
      %v1570 = vunpack.c.l.b16 %v1427
      %v1571 = vunpack.c.h.b16 %v1427
      %v1572 = vunpack.c.l.b16 %v1428
      %v1573 = vunpack.c.h.b16 %v1428
      %v1574 = vunpack.c.l.b16 %v1429
      %v1575 = vunpack.c.h.b16 %v1429
      %v1576 = vunpack.c.l.b16 %v1430
      %v1577 = vunpack.c.h.b16 %v1430
      %v1578 = vunpack.c.l.b16 %v1431
      %v1579 = vunpack.c.h.b16 %v1431
      %v1580 = vunpack.c.l.b16 %v1432
      %v1581 = vunpack.c.h.b16 %v1432
      %v1582 = vunpack.c.l.b16 %v1433
      %v1583 = vunpack.c.h.b16 %v1433
      %v1584 = vunpack.c.l.b16 %v1434
      %v1585 = vunpack.c.h.b16 %v1434
      %v1586 = vunpack.c.l.b16 %v1435
      %v1587 = vunpack.c.h.b16 %v1435
      %v1588 = vunpack.c.l.b16 %v1436
      %v1589 = vunpack.c.h.b16 %v1436
      %v1590 = vunpack.c.l.b16 %v1437
      %v1591 = vunpack.c.h.b16 %v1437
      %v1592 = vunpack.c.l.b16 %v1438
      %v1593 = vunpack.c.h.b16 %v1438
      %v1594 = vunpack.c.l.b16 %v1439
      %v1595 = vunpack.c.h.b16 %v1439
      %v1596 = vunpack.c.l.b16 %v1440
      %v1597 = vunpack.c.h.b16 %v1440
      %v1598 = vunpack.c.l.b16 %v1441
      %v1599 = vunpack.c.h.b16 %v1441
      %v1600 = vunpack.c.l.b16 %v1442
      %v1601 = vunpack.c.h.b16 %v1442
      %v1602 = vunpack.c.l.b16 %v1443
      %v1603 = vunpack.c.h.b16 %v1443
      %v1604 = vunpack.c.l.b16 %v1444
      %v1605 = vunpack.c.h.b16 %v1444
      %v1606 = vunpack.c.l.b16 %v1445
      %v1607 = vunpack.c.h.b16 %v1445
      %v1608 = vunpack.c.l.b16 %v1446
      %v1609 = vunpack.c.h.b16 %v1446
      %v1610 = vunpack.c.l.b16 %v1447
      %v1611 = vunpack.c.h.b16 %v1447
      %v1612 = vunpack.c.l.b16 %v1448
      %v1613 = vunpack.c.h.b16 %v1448
      %v1614 = vunpack.c.l.b16 %v1449
      %v1615 = vunpack.c.h.b16 %v1449
      %v1616 = vunpack.c.l.b16 %v1450
      %v1617 = vunpack.c.h.b16 %v1450
      %v1618 = vunpack.c.l.b16 %v1451
      %v1619 = vunpack.c.h.b16 %v1451
      %v1620 = vunpack.c.l.b16 %v1452
      %v1621 = vunpack.c.h.b16 %v1452
      %v1622 = vunpack.c.l.b16 %v1453
      %v1623 = vunpack.c.h.b16 %v1453
      %v1624 = vunpack.c.l.b16 %v1454
      %v1625 = vunpack.c.h.b16 %v1454
      %v1626 = vunpack.c.l.b16 %v1455
      %v1627 = vunpack.c.h.b16 %v1455
      %v1628 = vunpack.c.l.b16 %v1456
      %v1629 = vunpack.c.h.b16 %v1456
      %v1630 = vunpack.c.l.b16 %v1457
      %v1631 = vunpack.c.h.b16 %v1457
      %v1632 = vpack.c.b16 %v1516, %v1516
      %v1633 = vpack.c.b16 %v1517, %v1517
      %v1634 = vpack.c.b16 %v1518, %v1518
      %v1635 = vpack.c.b16 %v1519, %v1519
      %v1636 = vpack.c.b16 %v1520, %v1520
      %v1637 = vpack.c.b16 %v1521, %v1521
      %v1638 = vpack.c.b16 %v1522, %v1522
      %v1639 = vpack.c.b16 %v1523, %v1523
      %v1640 = vpack.c.b16 %v1524, %v1524
      %v1641 = vpack.c.b16 %v1525, %v1525
      %v1642 = vpack.c.b16 %v1526, %v1526
      %v1643 = vpack.c.b16 %v1527, %v1527
      %v1644 = vpack.c.b16 %v1528, %v1528
      %v1645 = vpack.c.b16 %v1529, %v1529
      %v1646 = vpack.c.b16 %v1530, %v1530
      %v1647 = vpack.c.b16 %v1531, %v1531
      %v1648 = vpack.c.b16 %v1532, %v1532
      %v1649 = vpack.c.b16 %v1533, %v1533
      %v1650 = vpack.c.b16 %v1534, %v1534
      %v1651 = vpack.c.b16 %v1535, %v1535
      %v1652 = vpack.c.b16 %v1536, %v1536
      %v1653 = vpack.c.b16 %v1537, %v1537
      %v1654 = vpack.c.b16 %v1538, %v1538
      %v1655 = vpack.c.b16 %v1539, %v1539
      %v1656 = vpack.c.b16 %v1540, %v1540
      %v1657 = vpack.c.b16 %v1541, %v1541
      %v1658 = vpack.c.b16 %v1542, %v1542
      %v1659 = vpack.c.b16 %v1543, %v1543
      %v1660 = vpack.c.b16 %v1544, %v1544
      %v1661 = vpack.c.b16 %v1545, %v1545
      %v1662 = vpack.c.b16 %v1546, %v1546
      %v1663 = vpack.c.b16 %v1547, %v1547
      %v1664 = vpack.c.b16 %v1548, %v1548
      %v1665 = vpack.c.b16 %v1549, %v1549
      %v1666 = vpack.c.b16 %v1550, %v1550
      %v1667 = vpack.c.b16 %v1551, %v1551
      %v1668 = vpack.c.b16 %v1552, %v1552
      %v1669 = vpack.c.b16 %v1553, %v1553
      %v1670 = vpack.c.b16 %v1554, %v1554
      %v1671 = vpack.c.b16 %v1555, %v1555
      %v1672 = vpack.c.b16 %v1556, %v1556
      %v1673 = vpack.c.b16 %v1557, %v1557
      %v1674 = vpack.c.b16 %v1558, %v1558
      %v1675 = vpack.c.b16 %v1559, %v1559
      %v1676 = vpack.c.b16 %v1560, %v1560
      %v1677 = vpack.c.b16 %v1561, %v1561
      %v1678 = vpack.c.b16 %v1562, %v1562
      %v1679 = vpack.c.b16 %v1563, %v1563
      %v1680 = vpack.c.b16 %v1564, %v1564
      %v1681 = vpack.c.b16 %v1565, %v1565
      %v1682 = vpack.c.b16 %v1566, %v1566
      %v1683 = vpack.c.b16 %v1567, %v1567
      %v1684 = vpack.c.b16 %v1568, %v1568
      %v1685 = vpack.c.b16 %v1569, %v1569
      %v1686 = vpack.c.b16 %v1570, %v1570
      %v1687 = vpack.c.b16 %v1571, %v1571
      %v1688 = vpack.c.b16 %v1572, %v1572
      %v1689 = vpack.c.b16 %v1573, %v1573
      %v1690 = vpack.c.b16 %v1574, %v1574
      %v1691 = vpack.c.b16 %v1575, %v1575
      %v1692 = vpack.c.b16 %v1576, %v1576
      %v1693 = vpack.c.b16 %v1577, %v1577
      %v1694 = vpack.c.b16 %v1578, %v1578
      %v1695 = vpack.c.b16 %v1579, %v1579
      %v1696 = vpack.c.b16 %v1580, %v1580
      %v1697 = vpack.c.b16 %v1581, %v1581
      %v1698 = vpack.c.b16 %v1582, %v1582
      %v1699 = vpack.c.b16 %v1583, %v1583
      %v1700 = vpack.c.b16 %v1584, %v1584
      %v1701 = vpack.c.b16 %v1585, %v1585
      %v1702 = vpack.c.b16 %v1586, %v1586
      %v1703 = vpack.c.b16 %v1587, %v1587
      %v1704 = vpack.c.b16 %v1588, %v1588
      %v1705 = vpack.c.b16 %v1589, %v1589
      %v1706 = vpack.c.b16 %v1590, %v1590
      %v1707 = vpack.c.b16 %v1591, %v1591
      %v1708 = vpack.c.b16 %v1592, %v1592
      %v1709 = vpack.c.b16 %v1593, %v1593
      %v1710 = vpack.c.b16 %v1594, %v1594
      %v1711 = vpack.c.b16 %v1595, %v1595
      %v1712 = vpack.c.b16 %v1596, %v1596
      %v1713 = vpack.c.b16 %v1597, %v1597
      %v1714 = vpack.c.b16 %v1598, %v1598
      %v1715 = vpack.c.b16 %v1599, %v1599
      %v1716 = vpack.c.b16 %v1600, %v1600
      %v1717 = vpack.c.b16 %v1601, %v1601
      %v1718 = vpack.c.b16 %v1602, %v1602
      %v1719 = vpack.c.b16 %v1603, %v1603
      %v1720 = vpack.c.b16 %v1604, %v1604
      %v1721 = vpack.c.b16 %v1605, %v1605
      %v1722 = vpack.c.b16 %v1606, %v1606
      %v1723 = vpack.c.b16 %v1607, %v1607
      %v1724 = vpack.c.b16 %v1608, %v1608
      %v1725 = vpack.c.b16 %v1609, %v1609
      %v1726 = vpack.c.b16 %v1610, %v1610
      %v1727 = vpack.c.b16 %v1611, %v1611
      %v1728 = vpack.c.b16 %v1612, %v1612
      %v1729 = vpack.c.b16 %v1613, %v1613
      %v1730 = vpack.c.b16 %v1614, %v1614
      %v1731 = vpack.c.b16 %v1615, %v1615
      %v1732 = vpack.c.b16 %v1616, %v1616
      %v1733 = vpack.c.b16 %v1617, %v1617
      %v1734 = vpack.c.b16 %v1618, %v1618
      %v1735 = vpack.c.b16 %v1619, %v1619
      %v1736 = vpack.c.b16 %v1620, %v1620
      %v1737 = vpack.c.b16 %v1621, %v1621
      %v1738 = vpack.c.b16 %v1622, %v1622
      %v1739 = vpack.c.b16 %v1623, %v1623
      %v1740 = vpack.c.b16 %v1624, %v1624
      %v1741 = vpack.c.b16 %v1625, %v1625
      %v1742 = vpack.c.b16 %v1626, %v1626
      %v1743 = vpack.c.b16 %v1627, %v1627
      %v1744 = vpack.c.b16 %v1628, %v1628
      %v1745 = vpack.c.b16 %v1629, %v1629
      %v1746 = vpack.c.b16 %v1630, %v1630
      %v1747 = vpack.c.b16 %v1631, %v1631
      %vm1864 = vcmask 519168
      %1865 = vst.msk [vmem:[%s172] sm:$0xf] %vm1864, %v1632
      %1866 = vst.msk [vmem:[%s172 + $0x4] sm:$0xf] %vm1864, %v1633
      %1867 = vst.msk [vmem:[%s172 + $0x8] sm:$0xf] %vm1864, %v1634
      %1868 = vst.msk [vmem:[%s172 + $0xc] sm:$0xf] %vm1864, %v1635
      %1869 = vst.msk [vmem:[%s172 + $0x10] sm:$0xf] %vm1864, %v1636
      %1870 = vst.msk [vmem:[%s172 + $0x14] sm:$0xf] %vm1864, %v1637
      %1871 = vst.msk [vmem:[%s172 + $0x18] sm:$0xf] %vm1864, %v1638
      %1872 = vst.msk [vmem:[%s172 + $0x1c] sm:$0xf] %vm1864, %v1639
      %1873 = vst.msk [vmem:[%s172 + $0x20] sm:$0xf] %vm1864, %v1640
      %1874 = vst.msk [vmem:[%s172 + $0x24] sm:$0xf] %vm1864, %v1641
      %1875 = vst.msk [vmem:[%s172 + $0x28] sm:$0xf] %vm1864, %v1642
      %1876 = vst.msk [vmem:[%s172 + $0x2c] sm:$0xf] %vm1864, %v1643
      %1877 = vst.msk [vmem:[%s172 + $0x30] sm:$0xf] %vm1864, %v1644
      %1878 = vst.msk [vmem:[%s172 + $0x34] sm:$0xf] %vm1864, %v1645
      %1879 = vst.msk [vmem:[%s172 + $0x38] sm:$0xf] %vm1864, %v1646
      %1880 = vst.msk [vmem:[%s172 + $0x3c] sm:$0xf] %vm1864, %v1647
      %1881 = vst.msk [vmem:[%s172 + $0x40] sm:$0xf] %vm1864, %v1648
      %1882 = vst.msk [vmem:[%s172 + $0x44] sm:$0xf] %vm1864, %v1649
      %1883 = vst.msk [vmem:[%s172 + $0x48] sm:$0xf] %vm1864, %v1650
      %1884 = vst.msk [vmem:[%s172 + $0x4c] sm:$0xf] %vm1864, %v1651
      %1885 = vst.msk [vmem:[%s172 + $0x50] sm:$0xf] %vm1864, %v1652
      %1886 = vst.msk [vmem:[%s172 + $0x54] sm:$0xf] %vm1864, %v1653
      %1887 = vst.msk [vmem:[%s172 + $0x58] sm:$0xf] %vm1864, %v1654
      %1888 = vst.msk [vmem:[%s172 + $0x5c] sm:$0xf] %vm1864, %v1655
      %1889 = vst.msk [vmem:[%s172 + $0x60] sm:$0xf] %vm1864, %v1656
      %1890 = vst.msk [vmem:[%s172 + $0x64] sm:$0xf] %vm1864, %v1657
      %1891 = vst.msk [vmem:[%s172 + $0x68] sm:$0xf] %vm1864, %v1658
      %1892 = vst.msk [vmem:[%s172 + $0x6c] sm:$0xf] %vm1864, %v1659
      %1893 = vst.msk [vmem:[%s172 + $0x70] sm:$0xf] %vm1864, %v1660
      %1894 = vst.msk [vmem:[%s172 + $0x74] sm:$0xf] %vm1864, %v1661
      %1895 = vst.msk [vmem:[%s172 + $0x78] sm:$0xf] %vm1864, %v1662
      %1896 = vst.msk [vmem:[%s172 + $0x7c] sm:$0xf] %vm1864, %v1663
      %1897 = vst.msk [vmem:[%s172 + $0x80] sm:$0xf] %vm1864, %v1664
      %1898 = vst.msk [vmem:[%s172 + $0x84] sm:$0xf] %vm1864, %v1665
      %1899 = vst.msk [vmem:[%s172 + $0x88] sm:$0xf] %vm1864, %v1666
      %1900 = vst.msk [vmem:[%s172 + $0x8c] sm:$0xf] %vm1864, %v1667
      %1901 = vst.msk [vmem:[%s172 + $0x90] sm:$0xf] %vm1864, %v1668
      %1902 = vst.msk [vmem:[%s172 + $0x94] sm:$0xf] %vm1864, %v1669
      %1903 = vst.msk [vmem:[%s172 + $0x98] sm:$0xf] %vm1864, %v1670
      %1904 = vst.msk [vmem:[%s172 + $0x9c] sm:$0xf] %vm1864, %v1671
      %1905 = vst.msk [vmem:[%s172 + $0xa0] sm:$0xf] %vm1864, %v1672
      %1906 = vst.msk [vmem:[%s172 + $0xa4] sm:$0xf] %vm1864, %v1673
      %1907 = vst.msk [vmem:[%s172 + $0xa8] sm:$0xf] %vm1864, %v1674
      %1908 = vst.msk [vmem:[%s172 + $0xac] sm:$0xf] %vm1864, %v1675
      %1909 = vst.msk [vmem:[%s172 + $0xb0] sm:$0xf] %vm1864, %v1676
      %1910 = vst.msk [vmem:[%s172 + $0xb4] sm:$0xf] %vm1864, %v1677
      %1911 = vst.msk [vmem:[%s172 + $0xb8] sm:$0xf] %vm1864, %v1678
      %1912 = vst.msk [vmem:[%s172 + $0xbc] sm:$0xf] %vm1864, %v1679
      %1913 = vst.msk [vmem:[%s172 + $0xc0] sm:$0xf] %vm1864, %v1680
      %1914 = vst.msk [vmem:[%s172 + $0xc4] sm:$0xf] %vm1864, %v1681
      %1915 = vst.msk [vmem:[%s172 + $0xc8] sm:$0xf] %vm1864, %v1682
      %1916 = vst.msk [vmem:[%s172 + $0xcc] sm:$0xf] %vm1864, %v1683
      %1917 = vst.msk [vmem:[%s172 + $0xd0] sm:$0xf] %vm1864, %v1684
      %1918 = vst.msk [vmem:[%s172 + $0xd4] sm:$0xf] %vm1864, %v1685
      %1919 = vst.msk [vmem:[%s172 + $0xd8] sm:$0xf] %vm1864, %v1686
      %1920 = vst.msk [vmem:[%s172 + $0xdc] sm:$0xf] %vm1864, %v1687
      %1921 = vst.msk [vmem:[%s172 + $0xe0] sm:$0xf] %vm1864, %v1688
      %1922 = vst.msk [vmem:[%s172 + $0xe4] sm:$0xf] %vm1864, %v1689
      %1923 = vst.msk [vmem:[%s172 + $0xe8] sm:$0xf] %vm1864, %v1690
      %1924 = vst.msk [vmem:[%s172 + $0xec] sm:$0xf] %vm1864, %v1691
      %1925 = vst.msk [vmem:[%s172 + $0xf0] sm:$0xf] %vm1864, %v1692
      %1926 = vst.msk [vmem:[%s172 + $0xf4] sm:$0xf] %vm1864, %v1693
      %1927 = vst.msk [vmem:[%s172 + $0xf8] sm:$0xf] %vm1864, %v1694
      %1928 = vst.msk [vmem:[%s172 + $0xfc] sm:$0xf] %vm1864, %v1695
      %1929 = vst.msk [vmem:[%s172 + $0x100] sm:$0xf] %vm1864, %v1696
      %1930 = vst.msk [vmem:[%s172 + $0x104] sm:$0xf] %vm1864, %v1697
      %1931 = vst.msk [vmem:[%s172 + $0x108] sm:$0xf] %vm1864, %v1698
      %1932 = vst.msk [vmem:[%s172 + $0x10c] sm:$0xf] %vm1864, %v1699
      %1933 = vst.msk [vmem:[%s172 + $0x110] sm:$0xf] %vm1864, %v1700
      %1934 = vst.msk [vmem:[%s172 + $0x114] sm:$0xf] %vm1864, %v1701
      %1935 = vst.msk [vmem:[%s172 + $0x118] sm:$0xf] %vm1864, %v1702
      %1936 = vst.msk [vmem:[%s172 + $0x11c] sm:$0xf] %vm1864, %v1703
      %1937 = vst.msk [vmem:[%s172 + $0x120] sm:$0xf] %vm1864, %v1704
      %1938 = vst.msk [vmem:[%s172 + $0x124] sm:$0xf] %vm1864, %v1705
      %1939 = vst.msk [vmem:[%s172 + $0x128] sm:$0xf] %vm1864, %v1706
      %1940 = vst.msk [vmem:[%s172 + $0x12c] sm:$0xf] %vm1864, %v1707
      %1941 = vst.msk [vmem:[%s172 + $0x130] sm:$0xf] %vm1864, %v1708
      %1942 = vst.msk [vmem:[%s172 + $0x134] sm:$0xf] %vm1864, %v1709
      %1943 = vst.msk [vmem:[%s172 + $0x138] sm:$0xf] %vm1864, %v1710
      %1944 = vst.msk [vmem:[%s172 + $0x13c] sm:$0xf] %vm1864, %v1711
      %1945 = vst.msk [vmem:[%s172 + $0x140] sm:$0xf] %vm1864, %v1712
      %1946 = vst.msk [vmem:[%s172 + $0x144] sm:$0xf] %vm1864, %v1713
      %1947 = vst.msk [vmem:[%s172 + $0x148] sm:$0xf] %vm1864, %v1714
      %1948 = vst.msk [vmem:[%s172 + $0x14c] sm:$0xf] %vm1864, %v1715
      %1949 = vst.msk [vmem:[%s172 + $0x150] sm:$0xf] %vm1864, %v1716
      %1950 = vst.msk [vmem:[%s172 + $0x154] sm:$0xf] %vm1864, %v1717
      %1951 = vst.msk [vmem:[%s172 + $0x158] sm:$0xf] %vm1864, %v1718
      %1952 = vst.msk [vmem:[%s172 + $0x15c] sm:$0xf] %vm1864, %v1719
      %1953 = vst.msk [vmem:[%s172 + $0x160] sm:$0xf] %vm1864, %v1720
      %1954 = vst.msk [vmem:[%s172 + $0x164] sm:$0xf] %vm1864, %v1721
      %1955 = vst.msk [vmem:[%s172 + $0x168] sm:$0xf] %vm1864, %v1722
      %1956 = vst.msk [vmem:[%s172 + $0x16c] sm:$0xf] %vm1864, %v1723
      %1957 = vst.msk [vmem:[%s172 + $0x170] sm:$0xf] %vm1864, %v1724
      %1958 = vst.msk [vmem:[%s172 + $0x174] sm:$0xf] %vm1864, %v1725
      %1959 = vst.msk [vmem:[%s172 + $0x178] sm:$0xf] %vm1864, %v1726
      %1960 = vst.msk [vmem:[%s172 + $0x17c] sm:$0xf] %vm1864, %v1727
      %1961 = vst.msk [vmem:[%s172 + $0x180] sm:$0xf] %vm1864, %v1728
      %1962 = vst.msk [vmem:[%s172 + $0x184] sm:$0xf] %vm1864, %v1729
      %1963 = vst.msk [vmem:[%s172 + $0x188] sm:$0xf] %vm1864, %v1730
      %1964 = vst.msk [vmem:[%s172 + $0x18c] sm:$0xf] %vm1864, %v1731
      %1965 = vst.msk [vmem:[%s172 + $0x190] sm:$0xf] %vm1864, %v1732
      %1966 = vst.msk [vmem:[%s172 + $0x194] sm:$0xf] %vm1864, %v1733
      %1967 = vst.msk [vmem:[%s172 + $0x198] sm:$0xf] %vm1864, %v1734
      %1968 = vst.msk [vmem:[%s172 + $0x19c] sm:$0xf] %vm1864, %v1735
      %1969 = vst.msk [vmem:[%s172 + $0x1a0] sm:$0xf] %vm1864, %v1736
      %1970 = vst.msk [vmem:[%s172 + $0x1a4] sm:$0xf] %vm1864, %v1737
      %1971 = vst.msk [vmem:[%s172 + $0x1a8] sm:$0xf] %vm1864, %v1738
      %1972 = vst.msk [vmem:[%s172 + $0x1ac] sm:$0xf] %vm1864, %v1739
      %1973 = vst.msk [vmem:[%s172 + $0x1b0] sm:$0xf] %vm1864, %v1740
      %1974 = vst.msk [vmem:[%s172 + $0x1b4] sm:$0xf] %vm1864, %v1741
      %1975 = vst.msk [vmem:[%s172 + $0x1b8] sm:$0xf] %vm1864, %v1742
      %1976 = vst.msk [vmem:[%s172 + $0x1bc] sm:$0xf] %vm1864, %v1743
      %1977 = vst.msk [vmem:[%s172 + $0x1c0] sm:$0xf] %vm1864, %v1744
      %1978 = vst.msk [vmem:[%s172 + $0x1c4] sm:$0xf] %vm1864, %v1745
      %1979 = vst.msk [vmem:[%s172 + $0x1c8] sm:$0xf] %vm1864, %v1746
      %1980 = vst.msk [vmem:[%s172 + $0x1cc] sm:$0xf] %vm1864, %v1747
      %s1981 = smul.u32 116, %s14
      %p1982 = scmp.lt.s32.totalorder %s1981, 579
      %s1983 = scalar_select %p1982, %s1981, 579
      %s1984 = smul.addr %s1983, 4
      %s1985 = scalar_lea.vmem %s3, %s1984
      // Predicated region
      $region33: #{tpu_custom_call.1} parent=31 // pred_check
        %p1986 = pneg %p100
      $region34: #{tpu_custom_call.1} parent=31 // pred_check_branch
        %1988 = sbr.rel (%p1986) target = $region36
      $region35: #{tpu_custom_call.1} parent=31 // pred_region
        %s1989 = smul.u32 116, %s14
      $region36: #{tpu_custom_call.1} parent=31 // pred_fallthru
        _
    $region32: #{tpu_custom_call.1} parent=5 // pred_fallthru
      _
    %p1990 = scmp.le.s32.totalorder 2, %s9
    // Predicated region
    $region37: #{tpu_custom_call.1} parent=5 // pred_check
      %p1991 = pneg %p1990
    $region38: #{tpu_custom_call.1} parent=5 // pred_check_branch
      %1993 = sbr.rel (%p1991) target = $region40
    $region39: #{tpu_custom_call.1} parent=5 // pred_region
      %s1994 = ssub.s32 %s9, 2
      // Predicated region
      $region41: #{tpu_custom_call.1} parent=39 // pred_check
        %p1995 = pneg %p106
      $region42: #{tpu_custom_call.1} parent=39 // pred_check_branch
        %1997 = sbr.rel (%p1995) target = $region44
      $region43: #{tpu_custom_call.1} parent=39 // pred_region
        %s1998 = smul.u32 116, %s15
        %p1999 = scmp.lt.s32.totalorder %s1998, 579
        %s2000 = scalar_select %p1999, %s1998, 579
        %s2001 = smul.addr %s2000, 4
        %s2002 = scalar_lea.vmem %s3, %s2001
      $region44: #{tpu_custom_call.1} parent=39 // pred_fallthru
        _
    $region40: #{tpu_custom_call.1} parent=5 // pred_fallthru
      _
  $region6: #{tpu_custom_call.1} parent=0 // loop_footer
    %s13 = sadd.s32 1, %s9
  $region7: #{tpu_custom_call.1} parent=0 // loop_footer_branch
    %8 = sbr.rel target = $region3
  $region8: #{tpu_custom_call.1} parent=0 // loop_exit
    _

</llo_original>
